<compile_context>
chip_gen: v6e
topology: v6e:2x2x1
jax: 0.10.0
libtpu: 0.0.40
codegen_flags: <defaults>
</compile_context>

<pallas_src>
import jax
import jax.numpy as jnp
from jax import lax
from jax.experimental import pallas as pl
from jax.experimental.pallas import tpu as pltpu


# ----------------------------------------------------------------------------
# Fused head:  LayerNorm -> Linear(+b) -> LayerNorm -> ReLU -> Linear -> MeanAct
# ----------------------------------------------------------------------------
_LN_EPS = 1e-5


def _roi_head_kernel(x_ref, ng_ref, nb_ref, w1_ref, b1_ref, lg_ref, lb_ref,
                     w2_ref, o_ref):
    # All math in f32 regardless of storage dtype; cast only on the store.
    x = x_ref[...].astype(jnp.float32)                        # (bm, D)

    # final self.norm LayerNorm
    mu = jnp.mean(x, axis=-1, keepdims=True)
    xc = x - mu
    var = jnp.mean(xc * xc, axis=-1, keepdims=True)
    xn = xc * lax.rsqrt(var + _LN_EPS)
    xn = xn * ng_ref[...].astype(jnp.float32) + nb_ref[...].astype(jnp.float32)

    # project.layers[0]: Linear(D -> D, bias=True)
    h = jnp.dot(xn, w1_ref[...].astype(jnp.float32),
                preferred_element_type=jnp.float32)
    h = h + b1_ref[...].astype(jnp.float32)

    # project.layers[1]: LayerNorm(D), then ReLU
    mu2 = jnp.mean(h, axis=-1, keepdims=True)
    hc = h - mu2
    var2 = jnp.mean(hc * hc, axis=-1, keepdims=True)
    hn = hc * lax.rsqrt(var2 + _LN_EPS)
    hn = hn * lg_ref[...].astype(jnp.float32) + lb_ref[...].astype(jnp.float32)
    hn = jnp.maximum(hn, 0.0)

    # project.layers[3]: Linear(D -> O, bias=False)
    y = jnp.dot(hn, w2_ref[...].astype(jnp.float32),
                preferred_element_type=jnp.float32)

    # MeanAct
    o_ref[...] = jnp.clip(jnp.exp(y), 1e-05, 1e06).astype(o_ref.dtype)


def roi_expression_head(x, params, *, block_rows=512):
    """Fused `mean_act(project(norm(x)))` over node rows.  x: (N, D) -> (N, O)."""
    n, d = x.shape
    o_dim = params["w2"].shape[1]
    itemsize = jnp.dtype(x.dtype).itemsize

    # Row-block: multiple of 8, capped so blocks stay well under VMEM limits.
    bm = min(block_rows, ((n + 7) // 8) * 8)
    bm = max(8, (bm // 8) * 8)
    pad = (-n) % bm
    xp = jnp.pad(x, ((0, pad), (0, 0))) if pad else x
    rows = n + pad
    grid = (rows // bm,)

    ng = params["norm_g"].reshape(1, d)
    nb = params["norm_b"].reshape(1, d)
    w1 = params["w1"]
    b1 = params["b1"].reshape(1, d)
    lg = params["ln_g"].reshape(1, d)
    lb = params["ln_b"].reshape(1, d)
    w2 = params["w2"]

    cost = pl.CostEstimate(
        flops=rows * (2 * d * d + 2 * d * o_dim + 12 * d),
        transcendentals=rows * (o_dim + 2),
        bytes_accessed=rows * (d + o_dim) * itemsize + (2 * d * d + 5 * d) * itemsize,
    )

    full = lambda i: (0, 0)
    rowblk = lambda i: (i, 0)

    out = pl.pallas_call(
        _roi_head_kernel,
        out_shape=jax.ShapeDtypeStruct((rows, o_dim), x.dtype),
        grid_spec=pltpu.PrefetchScalarGridSpec(
            num_scalar_prefetch=0,
            grid=grid,
            in_specs=[
                pl.BlockSpec((bm, d), rowblk),       # x rows
                pl.BlockSpec((1, d), full),          # norm gamma
                pl.BlockSpec((1, d), full),          # norm beta
                pl.BlockSpec((d, d), full),          # w1
                pl.BlockSpec((1, d), full),          # b1
                pl.BlockSpec((1, d), full),          # ln gamma
                pl.BlockSpec((1, d), full),          # ln beta
                pl.BlockSpec((d, o_dim), full),      # w2
            ],
            out_specs=pl.BlockSpec((bm, o_dim), rowblk),
        ),
        compiler_params=pltpu.CompilerParams(
            dimension_semantics=("parallel",),       # v7x: 2 TCs split the rows
            vmem_limit_bytes=64 * 1024 * 1024,
        ),
        cost_estimate=cost,
    )(xp, ng, nb, w1, b1, lg, lb, w2)

    return out[:n] if pad else out


def roi_head_ref(x, p):
    """Pure-JAX reference (f32, HIGHEST-precision matmuls)."""
    def ln(v, g, b):
        mu = jnp.mean(v, axis=-1, keepdims=True)
        var = jnp.mean((v - mu) ** 2, axis=-1, keepdims=True)
        return (v - mu) * lax.rsqrt(var + _LN_EPS) * g + b

    xn = ln(x.astype(jnp.float32), p["norm_g"], p["norm_b"])
    h = jnp.dot(xn, p["w1"], precision=lax.Precision.HIGHEST) + p["b1"]
    hn = jnp.maximum(ln(h, p["ln_g"], p["ln_b"]), 0.0)
    y = jnp.dot(hn, p["w2"], precision=lax.Precision.HIGHEST)
    return jnp.clip(jnp.exp(y), 1e-05, 1e06).astype(x.dtype)


def roi_expression_pooled(x, params, batch, num_graphs):
    """return_cells=False path: global_add_pool(mean_act(project(norm(x))))."""
    cells = roi_expression_head(x, params)
    # TODO(synk): global_add_pool is a ragged segment-sum; done in plain JAX.
    return jax.ops.segment_sum(cells, batch, num_segments=num_graphs)


# ----------------------------------------------------------------------------
# Stand-alone MeanAct kernel: y = clamp(exp(x), 1e-5, 1e6), lane-dense layout
# ----------------------------------------------------------------------------
_LANE_CANDIDATES = (4096, 2048, 1024, 512, 256, 128)
_FAST_PATH_BYTES = 256 * 1024
_TARGET_BLOCK_BYTES = 4 * 1024 * 1024


def _mean_act_kernel(x_ref, o_ref):
    x = x_ref[...].astype(jnp.float32)
    o_ref[...] = jnp.clip(jnp.exp(x), 1e-05, 1e06).astype(o_ref.dtype)


def _mean_act_xla(x):
    y = jnp.clip(jnp.exp(x.astype(jnp.float32)), 1e-05, 1e06)
    return y.astype(x.dtype)


def mean_act(x, *, force_pallas=False):
    """clamp(exp(x), 1e-5, 1e6) elementwise, as a lane-dense Pallas TPU kernel."""
    orig_shape = x.shape
    orig_dtype = x.dtype
    n = x.size
    itemsize = jnp.dtype(orig_dtype).itemsize

    if n == 0:
        return x
    if (not force_pallas) and (n * itemsize <= _FAST_PATH_BYTES):
        return _mean_act_xla(x)

    flat = x.reshape(-1)

    lane = None
    for cand in _LANE_CANDIDATES:
        if n % cand == 0:
            lane = cand
            break

    padded_n = n
    if lane is None:
        if n < 128:
            return _mean_act_xla(x)
        lane = 1024 if n >= 1024 else 128
        pad = (-n) % lane
        flat = jnp.pad(flat, (0, pad))
        padded_n = n + pad

    rows = padded_n // lane
    x2 = flat.reshape(rows, lane)

    if rows < 8:
        block_rows = rows
    else:
        rows_per_block = max(8, (_TARGET_BLOCK_BYTES // (lane * itemsize) // 8) * 8)
        block_rows = min(rows_per_block, (rows // 8) * 8)

    grid = (pl.cdiv(rows, block_rows),)

    cost = pl.CostEstimate(
        flops=2 * n,
        transcendentals=n,
        bytes_accessed=2 * n * itemsize,
    )

    out2 = pl.pallas_call(
        _mean_act_kernel,
        out_shape=jax.ShapeDtypeStruct((rows, lane), orig_dtype),
        grid_spec=pltpu.PrefetchScalarGridSpec(
            num_scalar_prefetch=0,
            grid=grid,
            in_specs=[pl.BlockSpec((block_rows, lane), lambda i: (i, 0))],
            out_specs=pl.BlockSpec((block_rows, lane), lambda i: (i, 0)),
        ),
        compiler_params=pltpu.CompilerParams(
            dimension_semantics=("parallel",),
            vmem_limit_bytes=32 * 1024 * 1024,
        ),
        cost_estimate=cost,
    )(x2)

    out = out2.reshape(-1)
    if padded_n != n:
        out = out[:n]
    return out.reshape(orig_shape)


# ----------------------------------------------------------------------------
if __name__ == "__main__":
    key = jax.random.PRNGKey(0)
    ks = jax.random.split(key, 10)

    # Shapes consistent with ROIExpression defaults (num_embed_features=128,
    # num_out_features=128); small node count for the demo.
    N, D, O = 256, 128, 128
    x = jax.random.normal(ks[0], (N, D), dtype=jnp.float32)

    params = {
        "norm_g": 1.0 + 0.1 * jax.random.normal(ks[1], (D,), dtype=jnp.float32),
        "norm_b": 0.1 * jax.random.normal(ks[2], (D,), dtype=jnp.float32),
        "w1": 0.08 * jax.random.normal(ks[3], (D, D), dtype=jnp.float32),
        "b1": 0.1 * jax.random.normal(ks[4], (D,), dtype=jnp.float32),
        "ln_g": 1.0 + 0.1 * jax.random.normal(ks[5], (D,), dtype=jnp.float32),
        "ln_b": 0.1 * jax.random.normal(ks[6], (D,), dtype=jnp.float32),
        "w2": 0.05 * jax.random.normal(ks[7], (D, O), dtype=jnp.float32),
    }

    # --- fused head (return_cells=True path) ---
    cells = roi_expression_head(x, params)
    jax.block_until_ready(cells)
    cells_ref = roi_head_ref(x, params)
    assert cells.shape == (N, O) and cells.dtype == x.dtype
    assert jnp.allclose(cells, cells_ref, rtol=3e-2, atol=1e-5), (
        "fused head mismatch, max abs err = %e"
        % float(jnp.max(jnp.abs(cells - cells_ref))))

    # --- pooled path (return_cells=False): global_add_pool over batch ids ---
    batch = jnp.concatenate([jnp.zeros(N // 2, jnp.int32),
                             jnp.ones(N - N // 2, jnp.int32)])
    pooled = roi_expression_pooled(x, params, batch, num_graphs=2)
    jax.block_until_ready(pooled)
    pooled_ref = jax.ops.segment_sum(cells_ref, batch, num_segments=2)
    assert pooled.shape == (2, O)
    assert jnp.allclose(pooled, pooled_ref, rtol=3e-2, atol=1e-3)

    # --- stand-alone MeanAct kernel ---
    xm = jax.random.normal(ks[8], (N, D), dtype=jnp.float32) * 3.0
    xm = xm.at[0, 0].set(20.0).at[0, 1].set(-20.0)   # hit both clamp bounds
    ref_m = jnp.clip(jnp.exp(xm), 1e-05, 1e06)

    ym = mean_act(xm, force_pallas=True)              # Pallas path
    jax.block_until_ready(ym)
    assert ym.shape == xm.shape and ym.dtype == xm.dtype
    assert jnp.allclose(ym, ref_m, rtol=1e-6, atol=1e-6)

    ym_fast = mean_act(xm)                            # small-input XLA fast path
    jax.block_until_ready(ym_fast)
    assert jnp.allclose(ym_fast, ref_m, rtol=1e-6, atol=1e-6)

    # Ragged / non-128-multiple case: tail padding + partial edge row block.
    xr = jax.random.normal(ks[9], (1000, 130), dtype=jnp.float32) * 3.0
    ref_r = jnp.clip(jnp.exp(xr), 1e-05, 1e06)
    yr = mean_act(xr)
    jax.block_until_ready(yr)
    assert yr.shape == xr.shape and yr.dtype == xr.dtype
    assert jnp.allclose(yr, ref_r, rtol=1e-6, atol=1e-6)

    print("KERNEL_OK")
</pallas_src>

<mosaic_0001>
module attributes {stable_mosaic.version = 11 : i64} {
  func.func @_roi_head_kernel(%arg0: i32, %arg1: memref<256x128xf32, #tpu.memory_space<vmem>>, %arg2: memref<1x128xf32, #tpu.memory_space<vmem>>, %arg3: memref<1x128xf32, #tpu.memory_space<vmem>>, %arg4: memref<128x128xf32, #tpu.memory_space<vmem>>, %arg5: memref<1x128xf32, #tpu.memory_space<vmem>>, %arg6: memref<1x128xf32, #tpu.memory_space<vmem>>, %arg7: memref<1x128xf32, #tpu.memory_space<vmem>>, %arg8: memref<128x128xf32, #tpu.memory_space<vmem>>, %arg9: memref<256x128xf32, #tpu.memory_space<vmem>>) attributes {dimension_semantics = [#tpu.dimension_semantics<parallel>], iteration_bounds = array<i64: 1>, scalar_prefetch = 0 : i64, scratch_operands = 0 : i64, tpu.core_type = #tpu.core_type<tc>, window_params = [{transform_indices = @transform_0, window_bounds = array<i64: 256, 128>}, {pipeline_mode = #tpu.pipeline_mode<synchronous>, transform_indices = @transform_1, window_bounds = array<i64: 1, 128>}, {pipeline_mode = #tpu.pipeline_mode<synchronous>, transform_indices = @transform_2, window_bounds = array<i64: 1, 128>}, {pipeline_mode = #tpu.pipeline_mode<synchronous>, transform_indices = @transform_3, window_bounds = array<i64: 128, 128>}, {pipeline_mode = #tpu.pipeline_mode<synchronous>, transform_indices = @transform_4, window_bounds = array<i64: 1, 128>}, {pipeline_mode = #tpu.pipeline_mode<synchronous>, transform_indices = @transform_5, window_bounds = array<i64: 1, 128>}, {pipeline_mode = #tpu.pipeline_mode<synchronous>, transform_indices = @transform_6, window_bounds = array<i64: 1, 128>}, {pipeline_mode = #tpu.pipeline_mode<synchronous>, transform_indices = @transform_7, window_bounds = array<i64: 128, 128>}, {transform_indices = @transform_8, window_bounds = array<i64: 256, 128>}]} {
    %c0 = arith.constant 0 : index
    %c0_0 = arith.constant 0 : index
    %0 = vector.load %arg1[%c0, %c0_0] : memref<256x128xf32, #tpu.memory_space<vmem>>, vector<256x128xf32>
    %cst = arith.constant dense<0.000000e+00> : vector<256xf32>
    %1 = vector.multi_reduction <add>, %0, %cst [1] : vector<256x128xf32> to vector<256xf32>
    %2 = vector.shape_cast %1 : vector<256xf32> to vector<256x1xf32>
    %cst_1 = arith.constant 1.280000e+02 : f32
    %3 = vector.broadcast %cst_1 : f32 to vector<256x1xf32>
    %4 = arith.divf %2, %3 : vector<256x1xf32>
    %5 = vector.broadcast %4 : vector<256x1xf32> to vector<256x128xf32>
    %6 = arith.subf %0, %5 : vector<256x128xf32>
    %7 = arith.mulf %6, %6 : vector<256x128xf32>
    %cst_2 = arith.constant dense<0.000000e+00> : vector<256xf32>
    %8 = vector.multi_reduction <add>, %7, %cst_2 [1] : vector<256x128xf32> to vector<256xf32>
    %9 = vector.shape_cast %8 : vector<256xf32> to vector<256x1xf32>
    %cst_3 = arith.constant 1.280000e+02 : f32
    %10 = vector.broadcast %cst_3 : f32 to vector<256x1xf32>
    %11 = arith.divf %9, %10 : vector<256x1xf32>
    %cst_4 = arith.constant 9.99999974E-6 : f32
    %12 = vector.broadcast %cst_4 : f32 to vector<256x1xf32>
    %13 = arith.addf %11, %12 : vector<256x1xf32>
    %14 = math.rsqrt %13 : vector<256x1xf32>
    %15 = vector.broadcast %14 : vector<256x1xf32> to vector<256x128xf32>
    %16 = arith.mulf %6, %15 : vector<256x128xf32>
    %c0_5 = arith.constant 0 : index
    %c0_6 = arith.constant 0 : index
    %17 = vector.load %arg2[%c0_5, %c0_6] : memref<1x128xf32, #tpu.memory_space<vmem>>, vector<1x128xf32>
    %18 = vector.broadcast %17 : vector<1x128xf32> to vector<256x128xf32>
    %19 = arith.mulf %16, %18 : vector<256x128xf32>
    %c0_7 = arith.constant 0 : index
    %c0_8 = arith.constant 0 : index
    %20 = vector.load %arg3[%c0_7, %c0_8] : memref<1x128xf32, #tpu.memory_space<vmem>>, vector<1x128xf32>
    %21 = vector.broadcast %20 : vector<1x128xf32> to vector<256x128xf32>
    %22 = arith.addf %19, %21 : vector<256x128xf32>
    %c0_9 = arith.constant 0 : index
    %c0_10 = arith.constant 0 : index
    %23 = vector.load %arg4[%c0_9, %c0_10] : memref<128x128xf32, #tpu.memory_space<vmem>>, vector<128x128xf32>
    %cst_11 = arith.constant dense<0.000000e+00> : vector<256x128xf32>
    %24 = tpu.matmul %22, %23, %cst_11 {dimension_numbers = #tpu.dot_dimension_numbers<[1], [0], [0], [1], [0, 0, 1, 1], [], []>} : vector<256x128xf32>, vector<128x128xf32>, vector<256x128xf32> -> vector<256x128xf32>
    %c0_12 = arith.constant 0 : index
    %c0_13 = arith.constant 0 : index
    %25 = vector.load %arg5[%c0_12, %c0_13] : memref<1x128xf32, #tpu.memory_space<vmem>>, vector<1x128xf32>
    %26 = vector.broadcast %25 : vector<1x128xf32> to vector<256x128xf32>
    %27 = arith.addf %24, %26 : vector<256x128xf32>
    %cst_14 = arith.constant dense<0.000000e+00> : vector<256xf32>
    %28 = vector.multi_reduction <add>, %27, %cst_14 [1] : vector<256x128xf32> to vector<256xf32>
    %29 = vector.shape_cast %28 : vector<256xf32> to vector<256x1xf32>
    %cst_15 = arith.constant 1.280000e+02 : f32
    %30 = vector.broadcast %cst_15 : f32 to vector<256x1xf32>
    %31 = arith.divf %29, %30 : vector<256x1xf32>
    %32 = vector.broadcast %31 : vector<256x1xf32> to vector<256x128xf32>
    %33 = arith.subf %27, %32 : vector<256x128xf32>
    %34 = arith.mulf %33, %33 : vector<256x128xf32>
    %cst_16 = arith.constant dense<0.000000e+00> : vector<256xf32>
    %35 = vector.multi_reduction <add>, %34, %cst_16 [1] : vector<256x128xf32> to vector<256xf32>
    %36 = vector.shape_cast %35 : vector<256xf32> to vector<256x1xf32>
    %cst_17 = arith.constant 1.280000e+02 : f32
    %37 = vector.broadcast %cst_17 : f32 to vector<256x1xf32>
    %38 = arith.divf %36, %37 : vector<256x1xf32>
    %cst_18 = arith.constant 9.99999974E-6 : f32
    %39 = vector.broadcast %cst_18 : f32 to vector<256x1xf32>
    %40 = arith.addf %38, %39 : vector<256x1xf32>
    %41 = math.rsqrt %40 : vector<256x1xf32>
    %42 = vector.broadcast %41 : vector<256x1xf32> to vector<256x128xf32>
    %43 = arith.mulf %33, %42 : vector<256x128xf32>
    %c0_19 = arith.constant 0 : index
    %c0_20 = arith.constant 0 : index
    %44 = vector.load %arg6[%c0_19, %c0_20] : memref<1x128xf32, #tpu.memory_space<vmem>>, vector<1x128xf32>
    %45 = vector.broadcast %44 : vector<1x128xf32> to vector<256x128xf32>
    %46 = arith.mulf %43, %45 : vector<256x128xf32>
    %c0_21 = arith.constant 0 : index
    %c0_22 = arith.constant 0 : index
    %47 = vector.load %arg7[%c0_21, %c0_22] : memref<1x128xf32, #tpu.memory_space<vmem>>, vector<1x128xf32>
    %48 = vector.broadcast %47 : vector<1x128xf32> to vector<256x128xf32>
    %49 = arith.addf %46, %48 : vector<256x128xf32>
    %cst_23 = arith.constant 0.000000e+00 : f32
    %50 = vector.broadcast %cst_23 : f32 to vector<256x128xf32>
    %51 = arith.maximumf %49, %50 : vector<256x128xf32>
    %c0_24 = arith.constant 0 : index
    %c0_25 = arith.constant 0 : index
    %52 = vector.load %arg8[%c0_24, %c0_25] : memref<128x128xf32, #tpu.memory_space<vmem>>, vector<128x128xf32>
    %cst_26 = arith.constant dense<0.000000e+00> : vector<256x128xf32>
    %53 = tpu.matmul %51, %52, %cst_26 {dimension_numbers = #tpu.dot_dimension_numbers<[1], [0], [0], [1], [0, 0, 1, 1], [], []>} : vector<256x128xf32>, vector<128x128xf32>, vector<256x128xf32> -> vector<256x128xf32>
    %54 = math.exp %53 : vector<256x128xf32>
    %cst_27 = arith.constant 9.99999974E-6 : f32
    %cst_28 = arith.constant 1.000000e+06 : f32
    %55 = vector.broadcast %cst_27 : f32 to vector<256x128xf32>
    %56 = arith.maximumf %55, %54 : vector<256x128xf32>
    %57 = vector.broadcast %cst_28 : f32 to vector<256x128xf32>
    %58 = arith.minimumf %57, %56 : vector<256x128xf32>
    %c0_29 = arith.constant 0 : index
    %c0_30 = arith.constant 0 : index
    %59 = vector.load %arg9[%c0_29, %c0_30] : memref<256x128xf32, #tpu.memory_space<vmem>>, vector<256x128xf32>
    tpu.vector_store %arg9[%c0_29, %c0_30], %58 {strides = array<i32>} : memref<256x128xf32, #tpu.memory_space<vmem>>, vector<256x128xf32>,
    return
  }
  func.func @transform_0(%arg0: i32) -> (i32, i32) {
    %c0_i32 = arith.constant 0 : i32
    %c0_i32_0 = arith.constant 0 : i32
    return %arg0, %c0_i32 : i32, i32
  }
  func.func @transform_1(%arg0: i32) -> (i32, i32) {
    %c0_i32 = arith.constant 0 : i32
    %c0_i32_0 = arith.constant 0 : i32
    %c0_i32_1 = arith.constant 0 : i32
    return %c0_i32, %c0_i32_0 : i32, i32
  }
  func.func @transform_2(%arg0: i32) -> (i32, i32) {
    %c0_i32 = arith.constant 0 : i32
    %c0_i32_0 = arith.constant 0 : i32
    %c0_i32_1 = arith.constant 0 : i32
    return %c0_i32, %c0_i32_0 : i32, i32
  }
  func.func @transform_3(%arg0: i32) -> (i32, i32) {
    %c0_i32 = arith.constant 0 : i32
    %c0_i32_0 = arith.constant 0 : i32
    %c0_i32_1 = arith.constant 0 : i32
    return %c0_i32, %c0_i32_0 : i32, i32
  }
  func.func @transform_4(%arg0: i32) -> (i32, i32) {
    %c0_i32 = arith.constant 0 : i32
    %c0_i32_0 = arith.constant 0 : i32
    %c0_i32_1 = arith.constant 0 : i32
    return %c0_i32, %c0_i32_0 : i32, i32
  }
  func.func @transform_5(%arg0: i32) -> (i32, i32) {
    %c0_i32 = arith.constant 0 : i32
    %c0_i32_0 = arith.constant 0 : i32
    %c0_i32_1 = arith.constant 0 : i32
    return %c0_i32, %c0_i32_0 : i32, i32
  }
  func.func @transform_6(%arg0: i32) -> (i32, i32) {
    %c0_i32 = arith.constant 0 : i32
    %c0_i32_0 = arith.constant 0 : i32
    %c0_i32_1 = arith.constant 0 : i32
    return %c0_i32, %c0_i32_0 : i32, i32
  }
  func.func @transform_7(%arg0: i32) -> (i32, i32) {
    %c0_i32 = arith.constant 0 : i32
    %c0_i32_0 = arith.constant 0 : i32
    %c0_i32_1 = arith.constant 0 : i32
    return %c0_i32, %c0_i32_0 : i32, i32
  }
  func.func @transform_8(%arg0: i32) -> (i32, i32) {
    %c0_i32 = arith.constant 0 : i32
    %c0_i32_0 = arith.constant 0 : i32
    return %arg0, %c0_i32 : i32, i32
  }
}

</mosaic_0001>

<llo_original>
// kernel: tpu_custom_call.1
$region0: #{tpu_custom_call.1}
  #allocation0 [shape = 'u32[]', space=smem, size = 0x4, offset = 0x4, fixed_abs, tag = 'smem constant byte address 0x4 - core index']
  #allocation1 [shape = 'u32[144,128]{1,0:T(1,128)}', space=vmem, size = 0x12000, scoped, tag = 'internal scratch']
  %s0 = inlined_call_operand.hbm [shape: f32[256,128], index: 0, kind: input, shape index: {}]
  %s1 = inlined_call_operand.vmem [shape: f32[1,128], index: 1, kind: input, shape index: {}]
  %s2 = inlined_call_operand.vmem [shape: f32[1,128], index: 2, kind: input, shape index: {}]
  %s3 = inlined_call_operand.hbm [shape: f32[128,128], index: 3, kind: input, shape index: {}]
  %s4 = inlined_call_operand.vmem [shape: f32[1,128], index: 4, kind: input, shape index: {}]
  %s5 = inlined_call_operand.vmem [shape: f32[1,128], index: 5, kind: input, shape index: {}]
  %s6 = inlined_call_operand.vmem [shape: f32[1,128], index: 6, kind: input, shape index: {}]
  %s7 = inlined_call_operand.hbm [shape: f32[128,128], index: 7, kind: input, shape index: {}]
  %s8 = inlined_call_operand.hbm [shape: f32[256,128], index: 8, kind: output, shape index: {}]
  %s9 = sld [smem:[#allocation0]]
  $region54: #{tpu_custom_call.1} parent=0
    _
  %s11 = ssub.s32 1, %s9
  %s12 = scalar_select 0, %s11, %s9
  $region1: #{tpu_custom_call.1} parent=0
    #allocation2 [shape = 'u8[131072]{0}', space=vmem, size = 0x20000, scoped, tag = 'input window, operand 0, single buffered']
    #allocation3 [shape = 's32[1]{0}', space=sflag, size = 0x4, scoped, tag = 'scoped memory for tpu_custom_call.1']
    #allocation4 [shape = 's32[1]{0}', space=sflag, size = 0x4, scoped, tag = 'scoped memory for tpu_custom_call.1']
    #allocation5 [shape = 'u8[65536]{0}', space=vmem, size = 0x10000, scoped, tag = 'input window, operand 3, single buffered']
    #allocation6 [shape = 's32[1]{0}', space=sflag, size = 0x4, scoped, tag = 'scoped memory for tpu_custom_call.1']
    #allocation7 [shape = 'u8[65536]{0}', space=vmem, size = 0x10000, scoped, tag = 'input window, operand 7, single buffered']
    #allocation8 [shape = 'u8[131072]{0}', space=vmem, size = 0x20000, scoped, tag = 'output window, operand 0, single buffered']
    %13 = vsyncpa [#allocation3], 0
    %14 = vsyncpa [#allocation6], 0
    %15 = vsyncpa [#allocation4], 0
    // Predicated region
    $region2: #{tpu_custom_call.1} parent=1 // pred_check
      _
    $region3: #{tpu_custom_call.1} parent=1 // pred_check_branch
      %17 = sbr.rel (0) target = $region5
    $region4: #{tpu_custom_call.1} parent=1 // pred_region
      %s19 = ssub.s32 4096, 4096
      %20 = vsyncadd [#allocation3], %s19
      %s21 = sshll.u32 [#allocation2], 4
      %s22 = int_to_ptr.vmem [resolvable:$true] %s21
      %27 = dma.hbm_to_vmem [thread:$0]  %s0, 4096, %s22, [#allocation3], 128, 128, 8
    $region5: #{tpu_custom_call.1} parent=1 // pred_fallthru
      _
    // Predicated region
    $region6: #{tpu_custom_call.1} parent=1 // pred_check
      _
    $region7: #{tpu_custom_call.1} parent=1 // pred_check_branch
      %29 = sbr.rel (0) target = $region9
    $region8: #{tpu_custom_call.1} parent=1 // pred_region
      _
    $region9: #{tpu_custom_call.1} parent=1 // pred_fallthru
      _
    // Predicated region
    $region10: #{tpu_custom_call.1} parent=1 // pred_check
      _
    $region11: #{tpu_custom_call.1} parent=1 // pred_check_branch
      %31 = sbr.rel (0) target = $region13
    $region12: #{tpu_custom_call.1} parent=1 // pred_region
      _
    $region13: #{tpu_custom_call.1} parent=1 // pred_fallthru
      _
    // Predicated region
    $region14: #{tpu_custom_call.1} parent=1 // pred_check
      _
    $region15: #{tpu_custom_call.1} parent=1 // pred_check_branch
      %33 = sbr.rel (0) target = $region17
    $region16: #{tpu_custom_call.1} parent=1 // pred_region
      %s35 = ssub.s32 2048, 2048
      %36 = vsyncadd [#allocation6], %s35
      %s37 = sshll.u32 [#allocation5], 4
      %s38 = int_to_ptr.vmem [resolvable:$true] %s37
      %43 = dma.hbm_to_vmem [thread:$0]  %s3, 2048, %s38, [#allocation6], 128, 128, 8
    $region17: #{tpu_custom_call.1} parent=1 // pred_fallthru
      _
    // Predicated region
    $region18: #{tpu_custom_call.1} parent=1 // pred_check
      _
    $region19: #{tpu_custom_call.1} parent=1 // pred_check_branch
      %45 = sbr.rel (0) target = $region21
    $region20: #{tpu_custom_call.1} parent=1 // pred_region
      _
    $region21: #{tpu_custom_call.1} parent=1 // pred_fallthru
      _
    // Predicated region
    $region22: #{tpu_custom_call.1} parent=1 // pred_check
      _
    $region23: #{tpu_custom_call.1} parent=1 // pred_check_branch
      %47 = sbr.rel (0) target = $region25
    $region24: #{tpu_custom_call.1} parent=1 // pred_region
      _
    $region25: #{tpu_custom_call.1} parent=1 // pred_fallthru
      _
    // Predicated region
    $region26: #{tpu_custom_call.1} parent=1 // pred_check
      _
    $region27: #{tpu_custom_call.1} parent=1 // pred_check_branch
      %49 = sbr.rel (0) target = $region29
    $region28: #{tpu_custom_call.1} parent=1 // pred_region
      _
    $region29: #{tpu_custom_call.1} parent=1 // pred_fallthru
      _
    // Predicated region
    $region30: #{tpu_custom_call.1} parent=1 // pred_check
      _
    $region31: #{tpu_custom_call.1} parent=1 // pred_check_branch
      %51 = sbr.rel (0) target = $region33
    $region32: #{tpu_custom_call.1} parent=1 // pred_region
      %s53 = ssub.s32 2048, 2048
      %54 = vsyncadd [#allocation6], %s53
      %s55 = sshll.u32 [#allocation7], 4
      %s56 = int_to_ptr.vmem [resolvable:$true] %s55
      %61 = dma.hbm_to_vmem [thread:$0]  %s7, 2048, %s56, [#allocation6], 128, 128, 8
    $region33: #{tpu_custom_call.1} parent=1 // pred_fallthru
      _
    // Predicated region
    $region34: #{tpu_custom_call.1} parent=1 // pred_check
      _
    $region35: #{tpu_custom_call.1} parent=1 // pred_check_branch
      %63 = sbr.rel (0) target = $region37
    $region36: #{tpu_custom_call.1} parent=1 // pred_region
      %64 = dma.done [#allocation3], 4096
    $region37: #{tpu_custom_call.1} parent=1 // pred_fallthru
      _
    // Predicated region
    $region38: #{tpu_custom_call.1} parent=1 // pred_check
      _
    $region39: #{tpu_custom_call.1} parent=1 // pred_check_branch
      %66 = sbr.rel (0) target = $region41
    $region40: #{tpu_custom_call.1} parent=1 // pred_region
      %67 = dma.done [#allocation6], 2048
    $region41: #{tpu_custom_call.1} parent=1 // pred_fallthru
      _
    // Predicated region
    $region42: #{tpu_custom_call.1} parent=1 // pred_check
      _
    $region43: #{tpu_custom_call.1} parent=1 // pred_check_branch
      %69 = sbr.rel (0) target = $region45
    $region44: #{tpu_custom_call.1} parent=1 // pred_region
      %70 = dma.done [#allocation6], 2048
    $region45: #{tpu_custom_call.1} parent=1 // pred_fallthru
      _
    %v71 = vld [vmem:[#allocation2] sm:$0xff]
    %v72 = vld [vmem:[#allocation2 + $0x8] sm:$0xff]
    %v73 = vld [vmem:[#allocation2 + $0x10] sm:$0xff]
    %v74 = vld [vmem:[#allocation2 + $0x18] sm:$0xff]
    %v75 = vld [vmem:[#allocation2 + $0x20] sm:$0xff]
    %v76 = vld [vmem:[#allocation2 + $0x28] sm:$0xff]
    %v77 = vld [vmem:[#allocation2 + $0x30] sm:$0xff]
    %v78 = vld [vmem:[#allocation2 + $0x38] sm:$0xff]
    %v79 = vld [vmem:[#allocation2 + $0x40] sm:$0xff]
    %v80 = vld [vmem:[#allocation2 + $0x48] sm:$0xff]
    %v81 = vld [vmem:[#allocation2 + $0x50] sm:$0xff]
    %v82 = vld [vmem:[#allocation2 + $0x58] sm:$0xff]
    %v83 = vld [vmem:[#allocation2 + $0x60] sm:$0xff]
    %v84 = vld [vmem:[#allocation2 + $0x68] sm:$0xff]
    %v85 = vld [vmem:[#allocation2 + $0x70] sm:$0xff]
    %v86 = vld [vmem:[#allocation2 + $0x78] sm:$0xff]
    %v87 = vld [vmem:[#allocation2 + $0x80] sm:$0xff]
    %v88 = vld [vmem:[#allocation2 + $0x88] sm:$0xff]
    %v89 = vld [vmem:[#allocation2 + $0x90] sm:$0xff]
    %v90 = vld [vmem:[#allocation2 + $0x98] sm:$0xff]
    %v91 = vld [vmem:[#allocation2 + $0xa0] sm:$0xff]
    %v92 = vld [vmem:[#allocation2 + $0xa8] sm:$0xff]
    %v93 = vld [vmem:[#allocation2 + $0xb0] sm:$0xff]
    %v94 = vld [vmem:[#allocation2 + $0xb8] sm:$0xff]
    %v95 = vld [vmem:[#allocation2 + $0xc0] sm:$0xff]
    %v96 = vld [vmem:[#allocation2 + $0xc8] sm:$0xff]
    %v97 = vld [vmem:[#allocation2 + $0xd0] sm:$0xff]
    %v98 = vld [vmem:[#allocation2 + $0xd8] sm:$0xff]
    %v99 = vld [vmem:[#allocation2 + $0xe0] sm:$0xff]
    %v100 = vld [vmem:[#allocation2 + $0xe8] sm:$0xff]
    %v101 = vld [vmem:[#allocation2 + $0xf0] sm:$0xff]
    %v102 = vld [vmem:[#allocation2 + $0xf8] sm:$0xff]
    %103 = vadd.xlane.f32.xlu0 %v71
    %v104 = vpop.xlane.xlu0 %103
    %105 = vadd.xlane.f32.xlu0 %v72
    %v106 = vpop.xlane.xlu0 %105
    %107 = vadd.xlane.f32.xlu0 %v73
    %v108 = vpop.xlane.xlu0 %107
    %109 = vadd.xlane.f32.xlu0 %v74
    %v110 = vpop.xlane.xlu0 %109
    %111 = vadd.xlane.f32.xlu0 %v75
    %v112 = vpop.xlane.xlu0 %111
    %113 = vadd.xlane.f32.xlu0 %v76
    %v114 = vpop.xlane.xlu0 %113
    %115 = vadd.xlane.f32.xlu0 %v77
    %v116 = vpop.xlane.xlu0 %115
    %117 = vadd.xlane.f32.xlu0 %v78
    %v118 = vpop.xlane.xlu0 %117
    %119 = vadd.xlane.f32.xlu0 %v79
    %v120 = vpop.xlane.xlu0 %119
    %121 = vadd.xlane.f32.xlu0 %v80
    %v122 = vpop.xlane.xlu0 %121
    %123 = vadd.xlane.f32.xlu0 %v81
    %v124 = vpop.xlane.xlu0 %123
    %125 = vadd.xlane.f32.xlu0 %v82
    %v126 = vpop.xlane.xlu0 %125
    %127 = vadd.xlane.f32.xlu0 %v83
    %v128 = vpop.xlane.xlu0 %127
    %129 = vadd.xlane.f32.xlu0 %v84
    %v130 = vpop.xlane.xlu0 %129
    %131 = vadd.xlane.f32.xlu0 %v85
    %v132 = vpop.xlane.xlu0 %131
    %133 = vadd.xlane.f32.xlu0 %v86
    %v134 = vpop.xlane.xlu0 %133
    %135 = vadd.xlane.f32.xlu0 %v87
    %v136 = vpop.xlane.xlu0 %135
    %137 = vadd.xlane.f32.xlu0 %v88
    %v138 = vpop.xlane.xlu0 %137
    %139 = vadd.xlane.f32.xlu0 %v89
    %v140 = vpop.xlane.xlu0 %139
    %141 = vadd.xlane.f32.xlu0 %v90
    %v142 = vpop.xlane.xlu0 %141
    %143 = vadd.xlane.f32.xlu0 %v91
    %v144 = vpop.xlane.xlu0 %143
    %145 = vadd.xlane.f32.xlu0 %v92
    %v146 = vpop.xlane.xlu0 %145
    %147 = vadd.xlane.f32.xlu0 %v93
    %v148 = vpop.xlane.xlu0 %147
    %149 = vadd.xlane.f32.xlu0 %v94
    %v150 = vpop.xlane.xlu0 %149
    %151 = vadd.xlane.f32.xlu0 %v95
    %v152 = vpop.xlane.xlu0 %151
    %153 = vadd.xlane.f32.xlu0 %v96
    %v154 = vpop.xlane.xlu0 %153
    %155 = vadd.xlane.f32.xlu0 %v97
    %v156 = vpop.xlane.xlu0 %155
    %157 = vadd.xlane.f32.xlu0 %v98
    %v158 = vpop.xlane.xlu0 %157
    %159 = vadd.xlane.f32.xlu0 %v99
    %v160 = vpop.xlane.xlu0 %159
    %161 = vadd.xlane.f32.xlu0 %v100
    %v162 = vpop.xlane.xlu0 %161
    %163 = vadd.xlane.f32.xlu0 %v101
    %v164 = vpop.xlane.xlu0 %163
    %165 = vadd.xlane.f32.xlu0 %v102
    %v166 = vpop.xlane.xlu0 %165
    %v167 = vrcp.pop 128.0
    %v168 = vmul.f32 %v104, %v167
    %v169 = vmul.f32 %v106, %v167
    %v170 = vmul.f32 %v108, %v167
    %v171 = vmul.f32 %v110, %v167
    %v172 = vmul.f32 %v112, %v167
    %v173 = vmul.f32 %v114, %v167
    %v174 = vmul.f32 %v116, %v167
    %v175 = vmul.f32 %v118, %v167
    %v176 = vmul.f32 %v120, %v167
    %v177 = vmul.f32 %v122, %v167
    %v178 = vmul.f32 %v124, %v167
    %v179 = vmul.f32 %v126, %v167
    %v180 = vmul.f32 %v128, %v167
    %v181 = vmul.f32 %v130, %v167
    %v182 = vmul.f32 %v132, %v167
    %v183 = vmul.f32 %v134, %v167
    %v184 = vmul.f32 %v136, %v167
    %v185 = vmul.f32 %v138, %v167
    %v186 = vmul.f32 %v140, %v167
    %v187 = vmul.f32 %v142, %v167
    %v188 = vmul.f32 %v144, %v167
    %v189 = vmul.f32 %v146, %v167
    %v190 = vmul.f32 %v148, %v167
    %v191 = vmul.f32 %v150, %v167
    %v192 = vmul.f32 %v152, %v167
    %v193 = vmul.f32 %v154, %v167
    %v194 = vmul.f32 %v156, %v167
    %v195 = vmul.f32 %v158, %v167
    %v196 = vmul.f32 %v160, %v167
    %v197 = vmul.f32 %v162, %v167
    %v198 = vmul.f32 %v164, %v167
    %v199 = vmul.f32 %v166, %v167
    %v200 = vsub.f32 %v71, %v168
    %v201 = vsub.f32 %v72, %v169
    %v202 = vsub.f32 %v73, %v170
    %v203 = vsub.f32 %v74, %v171
    %v204 = vsub.f32 %v75, %v172
    %v205 = vsub.f32 %v76, %v173
    %v206 = vsub.f32 %v77, %v174
    %v207 = vsub.f32 %v78, %v175
    %v208 = vsub.f32 %v79, %v176
    %v209 = vsub.f32 %v80, %v177
    %v210 = vsub.f32 %v81, %v178
    %v211 = vsub.f32 %v82, %v179
    %v212 = vsub.f32 %v83, %v180
    %v213 = vsub.f32 %v84, %v181
    %v214 = vsub.f32 %v85, %v182
    %v215 = vsub.f32 %v86, %v183
    %v216 = vsub.f32 %v87, %v184
    %v217 = vsub.f32 %v88, %v185
    %v218 = vsub.f32 %v89, %v186
    %v219 = vsub.f32 %v90, %v187
    %v220 = vsub.f32 %v91, %v188
    %v221 = vsub.f32 %v92, %v189
    %v222 = vsub.f32 %v93, %v190
    %v223 = vsub.f32 %v94, %v191
    %v224 = vsub.f32 %v95, %v192
    %v225 = vsub.f32 %v96, %v193
    %v226 = vsub.f32 %v97, %v194
    %v227 = vsub.f32 %v98, %v195
    %v228 = vsub.f32 %v99, %v196
    %v229 = vsub.f32 %v100, %v197
    %v230 = vsub.f32 %v101, %v198
    %v231 = vsub.f32 %v102, %v199
    %v232 = vmul.f32 %v200, %v200
    %v233 = vmul.f32 %v201, %v201
    %v234 = vmul.f32 %v202, %v202
    %v235 = vmul.f32 %v203, %v203
    %v236 = vmul.f32 %v204, %v204
    %v237 = vmul.f32 %v205, %v205
    %v238 = vmul.f32 %v206, %v206
    %v239 = vmul.f32 %v207, %v207
    %v240 = vmul.f32 %v208, %v208
    %v241 = vmul.f32 %v209, %v209
    %v242 = vmul.f32 %v210, %v210
    %v243 = vmul.f32 %v211, %v211
    %v244 = vmul.f32 %v212, %v212
    %v245 = vmul.f32 %v213, %v213
    %v246 = vmul.f32 %v214, %v214
    %v247 = vmul.f32 %v215, %v215
    %v248 = vmul.f32 %v216, %v216
    %v249 = vmul.f32 %v217, %v217
    %v250 = vmul.f32 %v218, %v218
    %v251 = vmul.f32 %v219, %v219
    %v252 = vmul.f32 %v220, %v220
    %v253 = vmul.f32 %v221, %v221
    %v254 = vmul.f32 %v222, %v222
    %v255 = vmul.f32 %v223, %v223
    %v256 = vmul.f32 %v224, %v224
    %v257 = vmul.f32 %v225, %v225
    %v258 = vmul.f32 %v226, %v226
    %v259 = vmul.f32 %v227, %v227
    %v260 = vmul.f32 %v228, %v228
    %v261 = vmul.f32 %v229, %v229
    %v262 = vmul.f32 %v230, %v230
    %v263 = vmul.f32 %v231, %v231
    %264 = vadd.xlane.f32.xlu0 %v232
    %v265 = vpop.xlane.xlu0 %264
    %266 = vadd.xlane.f32.xlu0 %v233
    %v267 = vpop.xlane.xlu0 %266
    %268 = vadd.xlane.f32.xlu0 %v234
    %v269 = vpop.xlane.xlu0 %268
    %270 = vadd.xlane.f32.xlu0 %v235
    %v271 = vpop.xlane.xlu0 %270
    %272 = vadd.xlane.f32.xlu0 %v236
    %v273 = vpop.xlane.xlu0 %272
    %274 = vadd.xlane.f32.xlu0 %v237
    %v275 = vpop.xlane.xlu0 %274
    %276 = vadd.xlane.f32.xlu0 %v238
    %v277 = vpop.xlane.xlu0 %276
    %278 = vadd.xlane.f32.xlu0 %v239
    %v279 = vpop.xlane.xlu0 %278
    %280 = vadd.xlane.f32.xlu0 %v240
    %v281 = vpop.xlane.xlu0 %280
    %282 = vadd.xlane.f32.xlu0 %v241
    %v283 = vpop.xlane.xlu0 %282
    %284 = vadd.xlane.f32.xlu0 %v242
    %v285 = vpop.xlane.xlu0 %284
    %286 = vadd.xlane.f32.xlu0 %v243
    %v287 = vpop.xlane.xlu0 %286
    %288 = vadd.xlane.f32.xlu0 %v244
    %v289 = vpop.xlane.xlu0 %288
    %290 = vadd.xlane.f32.xlu0 %v245
    %v291 = vpop.xlane.xlu0 %290
    %292 = vadd.xlane.f32.xlu0 %v246
    %v293 = vpop.xlane.xlu0 %292
    %294 = vadd.xlane.f32.xlu0 %v247
    %v295 = vpop.xlane.xlu0 %294
    %296 = vadd.xlane.f32.xlu0 %v248
    %v297 = vpop.xlane.xlu0 %296
    %298 = vadd.xlane.f32.xlu0 %v249
    %v299 = vpop.xlane.xlu0 %298
    %300 = vadd.xlane.f32.xlu0 %v250
    %v301 = vpop.xlane.xlu0 %300
    %302 = vadd.xlane.f32.xlu0 %v251
    %v303 = vpop.xlane.xlu0 %302
    %304 = vadd.xlane.f32.xlu0 %v252
    %v305 = vpop.xlane.xlu0 %304
    %306 = vadd.xlane.f32.xlu0 %v253
    %v307 = vpop.xlane.xlu0 %306
    %308 = vadd.xlane.f32.xlu0 %v254
    %v309 = vpop.xlane.xlu0 %308
    %310 = vadd.xlane.f32.xlu0 %v255
    %v311 = vpop.xlane.xlu0 %310
    %312 = vadd.xlane.f32.xlu0 %v256
    %v313 = vpop.xlane.xlu0 %312
    %314 = vadd.xlane.f32.xlu0 %v257
    %v315 = vpop.xlane.xlu0 %314
    %316 = vadd.xlane.f32.xlu0 %v258
    %v317 = vpop.xlane.xlu0 %316
    %318 = vadd.xlane.f32.xlu0 %v259
    %v319 = vpop.xlane.xlu0 %318
    %320 = vadd.xlane.f32.xlu0 %v260
    %v321 = vpop.xlane.xlu0 %320
    %322 = vadd.xlane.f32.xlu0 %v261
    %v323 = vpop.xlane.xlu0 %322
    %324 = vadd.xlane.f32.xlu0 %v262
    %v325 = vpop.xlane.xlu0 %324
    %326 = vadd.xlane.f32.xlu0 %v263
    %v327 = vpop.xlane.xlu0 %326
    %v328 = vmul.f32 %v265, %v167
    %v329 = vmul.f32 %v267, %v167
    %v330 = vmul.f32 %v269, %v167
    %v331 = vmul.f32 %v271, %v167
    %v332 = vmul.f32 %v273, %v167
    %v333 = vmul.f32 %v275, %v167
    %v334 = vmul.f32 %v277, %v167
    %v335 = vmul.f32 %v279, %v167
    %v336 = vmul.f32 %v281, %v167
    %v337 = vmul.f32 %v283, %v167
    %v338 = vmul.f32 %v285, %v167
    %v339 = vmul.f32 %v287, %v167
    %v340 = vmul.f32 %v289, %v167
    %v341 = vmul.f32 %v291, %v167
    %v342 = vmul.f32 %v293, %v167
    %v343 = vmul.f32 %v295, %v167
    %v344 = vmul.f32 %v297, %v167
    %v345 = vmul.f32 %v299, %v167
    %v346 = vmul.f32 %v301, %v167
    %v347 = vmul.f32 %v303, %v167
    %v348 = vmul.f32 %v305, %v167
    %v349 = vmul.f32 %v307, %v167
    %v350 = vmul.f32 %v309, %v167
    %v351 = vmul.f32 %v311, %v167
    %v352 = vmul.f32 %v313, %v167
    %v353 = vmul.f32 %v315, %v167
    %v354 = vmul.f32 %v317, %v167
    %v355 = vmul.f32 %v319, %v167
    %v356 = vmul.f32 %v321, %v167
    %v357 = vmul.f32 %v323, %v167
    %v358 = vmul.f32 %v325, %v167
    %v359 = vmul.f32 %v327, %v167
    %v360 = vadd.f32 %v328, 1e-05
    %v361 = vadd.f32 %v329, 1e-05
    %v362 = vadd.f32 %v330, 1e-05
    %v363 = vadd.f32 %v331, 1e-05
    %v364 = vadd.f32 %v332, 1e-05
    %v365 = vadd.f32 %v333, 1e-05
    %v366 = vadd.f32 %v334, 1e-05
    %v367 = vadd.f32 %v335, 1e-05
    %v368 = vadd.f32 %v336, 1e-05
    %v369 = vadd.f32 %v337, 1e-05
    %v370 = vadd.f32 %v338, 1e-05
    %v371 = vadd.f32 %v339, 1e-05
    %v372 = vadd.f32 %v340, 1e-05
    %v373 = vadd.f32 %v341, 1e-05
    %v374 = vadd.f32 %v342, 1e-05
    %v375 = vadd.f32 %v343, 1e-05
    %v376 = vadd.f32 %v344, 1e-05
    %v377 = vadd.f32 %v345, 1e-05
    %v378 = vadd.f32 %v346, 1e-05
    %v379 = vadd.f32 %v347, 1e-05
    %v380 = vadd.f32 %v348, 1e-05
    %v381 = vadd.f32 %v349, 1e-05
    %v382 = vadd.f32 %v350, 1e-05
    %v383 = vadd.f32 %v351, 1e-05
    %v384 = vadd.f32 %v352, 1e-05
    %v385 = vadd.f32 %v353, 1e-05
    %v386 = vadd.f32 %v354, 1e-05
    %v387 = vadd.f32 %v355, 1e-05
    %v388 = vadd.f32 %v356, 1e-05
    %v389 = vadd.f32 %v357, 1e-05
    %v390 = vadd.f32 %v358, 1e-05
    %v391 = vadd.f32 %v359, 1e-05
    %v392 = vrsqrt.pop %v360
    %v393 = vrsqrt.pop %v361
    %v394 = vrsqrt.pop %v362
    %v395 = vrsqrt.pop %v363
    %v396 = vrsqrt.pop %v364
    %v397 = vrsqrt.pop %v365
    %v398 = vrsqrt.pop %v366
    %v399 = vrsqrt.pop %v367
    %v400 = vrsqrt.pop %v368
    %v401 = vrsqrt.pop %v369
    %v402 = vrsqrt.pop %v370
    %v403 = vrsqrt.pop %v371
    %v404 = vrsqrt.pop %v372
    %v405 = vrsqrt.pop %v373
    %v406 = vrsqrt.pop %v374
    %v407 = vrsqrt.pop %v375
    %v408 = vrsqrt.pop %v376
    %v409 = vrsqrt.pop %v377
    %v410 = vrsqrt.pop %v378
    %v411 = vrsqrt.pop %v379
    %v412 = vrsqrt.pop %v380
    %v413 = vrsqrt.pop %v381
    %v414 = vrsqrt.pop %v382
    %v415 = vrsqrt.pop %v383
    %v416 = vrsqrt.pop %v384
    %v417 = vrsqrt.pop %v385
    %v418 = vrsqrt.pop %v386
    %v419 = vrsqrt.pop %v387
    %v420 = vrsqrt.pop %v388
    %v421 = vrsqrt.pop %v389
    %v422 = vrsqrt.pop %v390
    %v423 = vrsqrt.pop %v391
    %v424 = vmul.f32 %v200, %v392
    %v425 = vmul.f32 %v201, %v393
    %v426 = vmul.f32 %v202, %v394
    %v427 = vmul.f32 %v203, %v395
    %v428 = vmul.f32 %v204, %v396
    %v429 = vmul.f32 %v205, %v397
    %v430 = vmul.f32 %v206, %v398
    %v431 = vmul.f32 %v207, %v399
    %v432 = vmul.f32 %v208, %v400
    %v433 = vmul.f32 %v209, %v401
    %v434 = vmul.f32 %v210, %v402
    %v435 = vmul.f32 %v211, %v403
    %v436 = vmul.f32 %v212, %v404
    %v437 = vmul.f32 %v213, %v405
    %v438 = vmul.f32 %v214, %v406
    %v439 = vmul.f32 %v215, %v407
    %v440 = vmul.f32 %v216, %v408
    %v441 = vmul.f32 %v217, %v409
    %v442 = vmul.f32 %v218, %v410
    %v443 = vmul.f32 %v219, %v411
    %v444 = vmul.f32 %v220, %v412
    %v445 = vmul.f32 %v221, %v413
    %v446 = vmul.f32 %v222, %v414
    %v447 = vmul.f32 %v223, %v415
    %v448 = vmul.f32 %v224, %v416
    %v449 = vmul.f32 %v225, %v417
    %v450 = vmul.f32 %v226, %v418
    %v451 = vmul.f32 %v227, %v419
    %v452 = vmul.f32 %v228, %v420
    %v453 = vmul.f32 %v229, %v421
    %v454 = vmul.f32 %v230, %v422
    %v455 = vmul.f32 %v231, %v423
    %v456 = vld [vmem:[%s1] sm:$0x1]
    %v458 = vlaneseq
    %v459 = vshrl.u32 %v458, 7
    %v460 = vsub.s32 0, %v459
    %v461 = vrot.slane %v456, %v460
    %v463 = vmul.f32 %v424, %v461
    %v464 = vmul.f32 %v425, %v461
    %v465 = vmul.f32 %v426, %v461
    %v466 = vmul.f32 %v427, %v461
    %v467 = vmul.f32 %v428, %v461
    %v468 = vmul.f32 %v429, %v461
    %v469 = vmul.f32 %v430, %v461
    %v470 = vmul.f32 %v431, %v461
    %v471 = vmul.f32 %v432, %v461
    %v472 = vmul.f32 %v433, %v461
    %v473 = vmul.f32 %v434, %v461
    %v474 = vmul.f32 %v435, %v461
    %v475 = vmul.f32 %v436, %v461
    %v476 = vmul.f32 %v437, %v461
    %v477 = vmul.f32 %v438, %v461
    %v478 = vmul.f32 %v439, %v461
    %v479 = vmul.f32 %v440, %v461
    %v480 = vmul.f32 %v441, %v461
    %v481 = vmul.f32 %v442, %v461
    %v482 = vmul.f32 %v443, %v461
    %v483 = vmul.f32 %v444, %v461
    %v484 = vmul.f32 %v445, %v461
    %v485 = vmul.f32 %v446, %v461
    %v486 = vmul.f32 %v447, %v461
    %v487 = vmul.f32 %v448, %v461
    %v488 = vmul.f32 %v449, %v461
    %v489 = vmul.f32 %v450, %v461
    %v490 = vmul.f32 %v451, %v461
    %v491 = vmul.f32 %v452, %v461
    %v492 = vmul.f32 %v453, %v461
    %v493 = vmul.f32 %v454, %v461
    %v494 = vmul.f32 %v455, %v461
    %v495 = vld [vmem:[%s2] sm:$0x1]
    %v497 = vlaneseq
    %v498 = vshrl.u32 %v497, 7
    %v499 = vsub.s32 0, %v498
    %v500 = vrot.slane %v495, %v499
    %v502 = vadd.f32 %v463, %v500
    %v503 = vadd.f32 %v464, %v500
    %v504 = vadd.f32 %v465, %v500
    %v505 = vadd.f32 %v466, %v500
    %v506 = vadd.f32 %v467, %v500
    %v507 = vadd.f32 %v468, %v500
    %v508 = vadd.f32 %v469, %v500
    %v509 = vadd.f32 %v470, %v500
    %v510 = vadd.f32 %v471, %v500
    %v511 = vadd.f32 %v472, %v500
    %v512 = vadd.f32 %v473, %v500
    %v513 = vadd.f32 %v474, %v500
    %v514 = vadd.f32 %v475, %v500
    %v515 = vadd.f32 %v476, %v500
    %v516 = vadd.f32 %v477, %v500
    %v517 = vadd.f32 %v478, %v500
    %v518 = vadd.f32 %v479, %v500
    %v519 = vadd.f32 %v480, %v500
    %v520 = vadd.f32 %v481, %v500
    %v521 = vadd.f32 %v482, %v500
    %v522 = vadd.f32 %v483, %v500
    %v523 = vadd.f32 %v484, %v500
    %v524 = vadd.f32 %v485, %v500
    %v525 = vadd.f32 %v486, %v500
    %v526 = vadd.f32 %v487, %v500
    %v527 = vadd.f32 %v488, %v500
    %v528 = vadd.f32 %v489, %v500
    %v529 = vadd.f32 %v490, %v500
    %v530 = vadd.f32 %v491, %v500
    %v531 = vadd.f32 %v492, %v500
    %v532 = vadd.f32 %v493, %v500
    %v533 = vadd.f32 %v494, %v500
    %v534 = vld [vmem:[#allocation5] sm:$0xff]
    %v535 = vld [vmem:[#allocation5 + $0x8] sm:$0xff]
    %v536 = vld [vmem:[#allocation5 + $0x10] sm:$0xff]
    %v537 = vld [vmem:[#allocation5 + $0x18] sm:$0xff]
    %v538 = vld [vmem:[#allocation5 + $0x20] sm:$0xff]
    %v539 = vld [vmem:[#allocation5 + $0x28] sm:$0xff]
    %v540 = vld [vmem:[#allocation5 + $0x30] sm:$0xff]
    %v541 = vld [vmem:[#allocation5 + $0x38] sm:$0xff]
    %v542 = vld [vmem:[#allocation5 + $0x40] sm:$0xff]
    %v543 = vld [vmem:[#allocation5 + $0x48] sm:$0xff]
    %v544 = vld [vmem:[#allocation5 + $0x50] sm:$0xff]
    %v545 = vld [vmem:[#allocation5 + $0x58] sm:$0xff]
    %v546 = vld [vmem:[#allocation5 + $0x60] sm:$0xff]
    %v547 = vld [vmem:[#allocation5 + $0x68] sm:$0xff]
    %v548 = vld [vmem:[#allocation5 + $0x70] sm:$0xff]
    %v549 = vld [vmem:[#allocation5 + $0x78] sm:$0xff]
    %v550 = vld [vmem:[%s4] sm:$0x1]
    %v552 = vlaneseq
    %v553 = vshrl.u32 %v552, 7
    %v554 = vsub.s32 0, %v553
    %v555 = vrot.slane %v550, %v554
    %557 = vmatprep.subr.mxu0 0.0
    %558 = vmatpush1.msra.mxu0 %v549
    %559 = vmatprep.subr.mxu0 0.0
    %560 = vmatpush1.msra.mxu0 %v548
    %561 = vmatprep.subr.mxu0 0.0
    %562 = vmatpush1.msra.mxu0 %v547
    %563 = vmatprep.subr.mxu0 0.0
    %564 = vmatpush1.msra.mxu0 %v546
    %565 = vmatprep.subr.mxu0 0.0
    %566 = vmatpush1.msra.mxu0 %v545
    %567 = vmatprep.subr.mxu0 0.0
    %568 = vmatpush1.msra.mxu0 %v544
    %569 = vmatprep.subr.mxu0 0.0
    %570 = vmatpush1.msra.mxu0 %v543
    %571 = vmatprep.subr.mxu0 0.0
    %572 = vmatpush1.msra.mxu0 %v542
    %573 = vmatprep.subr.mxu0 0.0
    %574 = vmatpush1.msra.mxu0 %v541
    %575 = vmatprep.subr.mxu0 0.0
    %576 = vmatpush1.msra.mxu0 %v540
    %577 = vmatprep.subr.mxu0 0.0
    %578 = vmatpush1.msra.mxu0 %v539
    %579 = vmatprep.subr.mxu0 0.0
    %580 = vmatpush1.msra.mxu0 %v538
    %581 = vmatprep.subr.mxu0 0.0
    %582 = vmatpush1.msra.mxu0 %v537
    %583 = vmatprep.subr.mxu0 0.0
    %584 = vmatpush1.msra.mxu0 %v536
    %585 = vmatprep.subr.mxu0 0.0
    %586 = vmatpush1.msra.mxu0 %v535
    %587 = vmatprep.subr.mxu0 0.0
    %588 = vmatpush1.msra.mxu0 %v534
    %589 = vmatprep.subr.mxu0 0.0
    %590 = vmatpush2.msra.mxu0 0.0
    %591 = vmatprep.subr.mxu0 0.0
    %592 = vmatpush2.msra.mxu0 0.0
    %593 = vmatprep.subr.mxu0 0.0
    %594 = vmatpush2.msra.mxu0 0.0
    %595 = vmatprep.subr.mxu0 0.0
    %596 = vmatpush2.msra.mxu0 0.0
    %597 = vmatprep.subr.mxu0 0.0
    %598 = vmatpush2.msra.mxu0 0.0
    %599 = vmatprep.subr.mxu0 0.0
    %600 = vmatpush2.msra.mxu0 0.0
    %601 = vmatprep.subr.mxu0 0.0
    %602 = vmatpush2.msra.mxu0 0.0
    %603 = vmatprep.subr.mxu0 0.0
    %604 = vmatpush2.msra.mxu0 0.0
    %605 = vmatprep.subr.mxu0 0.0
    %606 = vmatpush2.msra.mxu0 0.0
    %607 = vmatprep.subr.mxu0 0.0
    %608 = vmatpush2.msra.mxu0 0.0
    %609 = vmatprep.subr.mxu0 0.0
    %610 = vmatpush2.msra.mxu0 0.0
    %611 = vmatprep.subr.mxu0 0.0
    %612 = vmatpush2.msra.mxu0 0.0
    %613 = vmatprep.subr.mxu0 0.0
    %614 = vmatpush2.msra.mxu0 0.0
    %615 = vmatprep.subr.mxu0 0.0
    %616 = vmatpush2.msra.mxu0 0.0
    %617 = vmatprep.subr.mxu0 0.0
    %618 = vmatpush2.msra.mxu0 0.0
    %619 = vmatprep.subr.mxu0 0.0
    %620 = vmatpush2.msra.mxu0 0.0
    %621 = vmatprep.mubr.f32.mxu0 0.0
    %622 = vmatmul.mubr.f32.gmra.mxu0 %v502
    %v623 = vpop.f32.mrf.mxu0
    %v624 = vadd.f32 %v555, %v623
    %v625 = vpop.f32.mrf.mxu0
    %626 = vmatprep.mubr.f32.mxu0 0.0
    %627 = vmatmul.mubr.f32.gmra.mxu0 %v503
    %v628 = vpop.f32.mrf.mxu0
    %v629 = vadd.f32 %v555, %v628
    %v630 = vpop.f32.mrf.mxu0
    %631 = vmatprep.mubr.f32.mxu0 0.0
    %632 = vmatmul.mubr.f32.gmra.mxu0 %v504
    %v633 = vpop.f32.mrf.mxu0
    %v634 = vadd.f32 %v555, %v633
    %v635 = vpop.f32.mrf.mxu0
    %636 = vmatprep.mubr.f32.mxu0 0.0
    %637 = vmatmul.mubr.f32.gmra.mxu0 %v505
    %v638 = vpop.f32.mrf.mxu0
    %v639 = vadd.f32 %v555, %v638
    %v640 = vpop.f32.mrf.mxu0
    %641 = vmatprep.mubr.f32.mxu0 0.0
    %642 = vmatmul.mubr.f32.gmra.mxu0 %v506
    %v643 = vpop.f32.mrf.mxu0
    %v644 = vadd.f32 %v555, %v643
    %v645 = vpop.f32.mrf.mxu0
    %646 = vmatprep.mubr.f32.mxu0 0.0
    %647 = vmatmul.mubr.f32.gmra.mxu0 %v507
    %v648 = vpop.f32.mrf.mxu0
    %v649 = vadd.f32 %v555, %v648
    %v650 = vpop.f32.mrf.mxu0
    %651 = vmatprep.mubr.f32.mxu0 0.0
    %652 = vmatmul.mubr.f32.gmra.mxu0 %v508
    %v653 = vpop.f32.mrf.mxu0
    %v654 = vadd.f32 %v555, %v653
    %v655 = vpop.f32.mrf.mxu0
    %656 = vmatprep.mubr.f32.mxu0 0.0
    %657 = vmatmul.mubr.f32.gmra.mxu0 %v509
    %v658 = vpop.f32.mrf.mxu0
    %v659 = vadd.f32 %v555, %v658
    %v660 = vpop.f32.mrf.mxu0
    %661 = vmatprep.mubr.f32.mxu0 0.0
    %662 = vmatmul.mubr.f32.gmra.mxu0 %v510
    %v663 = vpop.f32.mrf.mxu0
    %v664 = vadd.f32 %v555, %v663
    %v665 = vpop.f32.mrf.mxu0
    %666 = vmatprep.mubr.f32.mxu0 0.0
    %667 = vmatmul.mubr.f32.gmra.mxu0 %v511
    %v668 = vpop.f32.mrf.mxu0
    %v669 = vadd.f32 %v555, %v668
    %v670 = vpop.f32.mrf.mxu0
    %671 = vmatprep.mubr.f32.mxu0 0.0
    %672 = vmatmul.mubr.f32.gmra.mxu0 %v512
    %v673 = vpop.f32.mrf.mxu0
    %v674 = vadd.f32 %v555, %v673
    %v675 = vpop.f32.mrf.mxu0
    %676 = vmatprep.mubr.f32.mxu0 0.0
    %677 = vmatmul.mubr.f32.gmra.mxu0 %v513
    %v678 = vpop.f32.mrf.mxu0
    %v679 = vadd.f32 %v555, %v678
    %v680 = vpop.f32.mrf.mxu0
    %681 = vmatprep.mubr.f32.mxu0 0.0
    %682 = vmatmul.mubr.f32.gmra.mxu0 %v514
    %v683 = vpop.f32.mrf.mxu0
    %v684 = vadd.f32 %v555, %v683
    %v685 = vpop.f32.mrf.mxu0
    %686 = vmatprep.mubr.f32.mxu0 0.0
    %687 = vmatmul.mubr.f32.gmra.mxu0 %v515
    %v688 = vpop.f32.mrf.mxu0
    %v689 = vadd.f32 %v555, %v688
    %v690 = vpop.f32.mrf.mxu0
    %691 = vmatprep.mubr.f32.mxu0 0.0
    %692 = vmatmul.mubr.f32.gmra.mxu0 %v516
    %v693 = vpop.f32.mrf.mxu0
    %v694 = vadd.f32 %v555, %v693
    %v695 = vpop.f32.mrf.mxu0
    %696 = vmatprep.mubr.f32.mxu0 0.0
    %697 = vmatmul.mubr.f32.gmra.mxu0 %v517
    %v698 = vpop.f32.mrf.mxu0
    %v699 = vadd.f32 %v555, %v698
    %v700 = vpop.f32.mrf.mxu0
    %701 = vmatprep.mubr.f32.mxu0 0.0
    %702 = vmatmul.mubr.f32.gmra.mxu0 %v518
    %v703 = vpop.f32.mrf.mxu0
    %v704 = vadd.f32 %v555, %v703
    %v705 = vpop.f32.mrf.mxu0
    %706 = vmatprep.mubr.f32.mxu0 0.0
    %707 = vmatmul.mubr.f32.gmra.mxu0 %v519
    %v708 = vpop.f32.mrf.mxu0
    %v709 = vadd.f32 %v555, %v708
    %v710 = vpop.f32.mrf.mxu0
    %711 = vmatprep.mubr.f32.mxu0 0.0
    %712 = vmatmul.mubr.f32.gmra.mxu0 %v520
    %v713 = vpop.f32.mrf.mxu0
    %v714 = vadd.f32 %v555, %v713
    %v715 = vpop.f32.mrf.mxu0
    %716 = vmatprep.mubr.f32.mxu0 0.0
    %717 = vmatmul.mubr.f32.gmra.mxu0 %v521
    %v718 = vpop.f32.mrf.mxu0
    %v719 = vadd.f32 %v555, %v718
    %v720 = vpop.f32.mrf.mxu0
    %721 = vmatprep.mubr.f32.mxu0 0.0
    %722 = vmatmul.mubr.f32.gmra.mxu0 %v522
    %v723 = vpop.f32.mrf.mxu0
    %v724 = vadd.f32 %v555, %v723
    %v725 = vpop.f32.mrf.mxu0
    %726 = vmatprep.mubr.f32.mxu0 0.0
    %727 = vmatmul.mubr.f32.gmra.mxu0 %v523
    %v728 = vpop.f32.mrf.mxu0
    %v729 = vadd.f32 %v555, %v728
    %v730 = vpop.f32.mrf.mxu0
    %731 = vmatprep.mubr.f32.mxu0 0.0
    %732 = vmatmul.mubr.f32.gmra.mxu0 %v524
    %v733 = vpop.f32.mrf.mxu0
    %v734 = vadd.f32 %v555, %v733
    %v735 = vpop.f32.mrf.mxu0
    %736 = vmatprep.mubr.f32.mxu0 0.0
    %737 = vmatmul.mubr.f32.gmra.mxu0 %v525
    %v738 = vpop.f32.mrf.mxu0
    %v739 = vadd.f32 %v555, %v738
    %v740 = vpop.f32.mrf.mxu0
    %741 = vmatprep.mubr.f32.mxu0 0.0
    %742 = vmatmul.mubr.f32.gmra.mxu0 %v526
    %v743 = vpop.f32.mrf.mxu0
    %v744 = vadd.f32 %v555, %v743
    %v745 = vpop.f32.mrf.mxu0
    %746 = vmatprep.mubr.f32.mxu0 0.0
    %747 = vmatmul.mubr.f32.gmra.mxu0 %v527
    %v748 = vpop.f32.mrf.mxu0
    %v749 = vadd.f32 %v555, %v748
    %v750 = vpop.f32.mrf.mxu0
    %751 = vmatprep.mubr.f32.mxu0 0.0
    %752 = vmatmul.mubr.f32.gmra.mxu0 %v528
    %v753 = vpop.f32.mrf.mxu0
    %v754 = vadd.f32 %v555, %v753
    %v755 = vpop.f32.mrf.mxu0
    %756 = vmatprep.mubr.f32.mxu0 0.0
    %757 = vmatmul.mubr.f32.gmra.mxu0 %v529
    %v758 = vpop.f32.mrf.mxu0
    %v759 = vadd.f32 %v555, %v758
    %v760 = vpop.f32.mrf.mxu0
    %761 = vmatprep.mubr.f32.mxu0 0.0
    %762 = vmatmul.mubr.f32.gmra.mxu0 %v530
    %v763 = vpop.f32.mrf.mxu0
    %v764 = vadd.f32 %v555, %v763
    %v765 = vpop.f32.mrf.mxu0
    %766 = vmatprep.mubr.f32.mxu0 0.0
    %767 = vmatmul.mubr.f32.gmra.mxu0 %v531
    %v768 = vpop.f32.mrf.mxu0
    %v769 = vadd.f32 %v555, %v768
    %v770 = vpop.f32.mrf.mxu0
    %771 = vmatprep.mubr.f32.mxu0 0.0
    %772 = vmatmul.mubr.f32.gmra.mxu0 %v532
    %v773 = vpop.f32.mrf.mxu0
    %v774 = vadd.f32 %v555, %v773
    %v775 = vpop.f32.mrf.mxu0
    %776 = vmatprep.mubr.f32.mxu0 0.0
    %777 = vmatmul.mubr.f32.gmra.mxu0 %v533
    %v778 = vpop.f32.mrf.mxu0
    %v779 = vadd.f32 %v555, %v778
    %v780 = vpop.f32.mrf.mxu0
    %781 = vdwg.mxu0
    %782 = vadd.xlane.f32.xlu0 %v624
    %v783 = vpop.xlane.xlu0 %782
    %784 = vadd.xlane.f32.xlu0 %v629
    %v785 = vpop.xlane.xlu0 %784
    %786 = vadd.xlane.f32.xlu0 %v634
    %v787 = vpop.xlane.xlu0 %786
    %788 = vadd.xlane.f32.xlu0 %v639
    %v789 = vpop.xlane.xlu0 %788
    %790 = vadd.xlane.f32.xlu0 %v644
    %v791 = vpop.xlane.xlu0 %790
    %792 = vadd.xlane.f32.xlu0 %v649
    %v793 = vpop.xlane.xlu0 %792
    %794 = vadd.xlane.f32.xlu0 %v654
    %v795 = vpop.xlane.xlu0 %794
    %796 = vadd.xlane.f32.xlu0 %v659
    %v797 = vpop.xlane.xlu0 %796
    %798 = vadd.xlane.f32.xlu0 %v664
    %v799 = vpop.xlane.xlu0 %798
    %800 = vadd.xlane.f32.xlu0 %v669
    %v801 = vpop.xlane.xlu0 %800
    %802 = vadd.xlane.f32.xlu0 %v674
    %v803 = vpop.xlane.xlu0 %802
    %804 = vadd.xlane.f32.xlu0 %v679
    %v805 = vpop.xlane.xlu0 %804
    %806 = vadd.xlane.f32.xlu0 %v684
    %v807 = vpop.xlane.xlu0 %806
    %808 = vadd.xlane.f32.xlu0 %v689
    %v809 = vpop.xlane.xlu0 %808
    %810 = vadd.xlane.f32.xlu0 %v694
    %v811 = vpop.xlane.xlu0 %810
    %812 = vadd.xlane.f32.xlu0 %v699
    %v813 = vpop.xlane.xlu0 %812
    %814 = vadd.xlane.f32.xlu0 %v704
    %v815 = vpop.xlane.xlu0 %814
    %816 = vadd.xlane.f32.xlu0 %v709
    %v817 = vpop.xlane.xlu0 %816
    %818 = vadd.xlane.f32.xlu0 %v714
    %v819 = vpop.xlane.xlu0 %818
    %820 = vadd.xlane.f32.xlu0 %v719
    %v821 = vpop.xlane.xlu0 %820
    %822 = vadd.xlane.f32.xlu0 %v724
    %v823 = vpop.xlane.xlu0 %822
    %824 = vadd.xlane.f32.xlu0 %v729
    %v825 = vpop.xlane.xlu0 %824
    %826 = vadd.xlane.f32.xlu0 %v734
    %v827 = vpop.xlane.xlu0 %826
    %828 = vadd.xlane.f32.xlu0 %v739
    %v829 = vpop.xlane.xlu0 %828
    %830 = vadd.xlane.f32.xlu0 %v744
    %v831 = vpop.xlane.xlu0 %830
    %832 = vadd.xlane.f32.xlu0 %v749
    %v833 = vpop.xlane.xlu0 %832
    %834 = vadd.xlane.f32.xlu0 %v754
    %v835 = vpop.xlane.xlu0 %834
    %836 = vadd.xlane.f32.xlu0 %v759
    %v837 = vpop.xlane.xlu0 %836
    %838 = vadd.xlane.f32.xlu0 %v764
    %v839 = vpop.xlane.xlu0 %838
    %840 = vadd.xlane.f32.xlu0 %v769
    %v841 = vpop.xlane.xlu0 %840
    %842 = vadd.xlane.f32.xlu0 %v774
    %v843 = vpop.xlane.xlu0 %842
    %844 = vadd.xlane.f32.xlu0 %v779
    %v845 = vpop.xlane.xlu0 %844
    %v846 = vmul.f32 %v783, %v167
    %v847 = vmul.f32 %v785, %v167
    %v848 = vmul.f32 %v787, %v167
    %v849 = vmul.f32 %v789, %v167
    %v850 = vmul.f32 %v791, %v167
    %v851 = vmul.f32 %v793, %v167
    %v852 = vmul.f32 %v795, %v167
    %v853 = vmul.f32 %v797, %v167
    %v854 = vmul.f32 %v799, %v167
    %v855 = vmul.f32 %v801, %v167
    %v856 = vmul.f32 %v803, %v167
    %v857 = vmul.f32 %v805, %v167
    %v858 = vmul.f32 %v807, %v167
    %v859 = vmul.f32 %v809, %v167
    %v860 = vmul.f32 %v811, %v167
    %v861 = vmul.f32 %v813, %v167
    %v862 = vmul.f32 %v815, %v167
    %v863 = vmul.f32 %v817, %v167
    %v864 = vmul.f32 %v819, %v167
    %v865 = vmul.f32 %v821, %v167
    %v866 = vmul.f32 %v823, %v167
    %v867 = vmul.f32 %v825, %v167
    %v868 = vmul.f32 %v827, %v167
    %v869 = vmul.f32 %v829, %v167
    %v870 = vmul.f32 %v831, %v167
    %v871 = vmul.f32 %v833, %v167
    %v872 = vmul.f32 %v835, %v167
    %v873 = vmul.f32 %v837, %v167
    %v874 = vmul.f32 %v839, %v167
    %v875 = vmul.f32 %v841, %v167
    %v876 = vmul.f32 %v843, %v167
    %v877 = vmul.f32 %v845, %v167
    %v878 = vsub.f32 %v624, %v846
    %v879 = vsub.f32 %v629, %v847
    %v880 = vsub.f32 %v634, %v848
    %v881 = vsub.f32 %v639, %v849
    %v882 = vsub.f32 %v644, %v850
    %v883 = vsub.f32 %v649, %v851
    %v884 = vsub.f32 %v654, %v852
    %v885 = vsub.f32 %v659, %v853
    %v886 = vsub.f32 %v664, %v854
    %v887 = vsub.f32 %v669, %v855
    %v888 = vsub.f32 %v674, %v856
    %v889 = vsub.f32 %v679, %v857
    %v890 = vsub.f32 %v684, %v858
    %v891 = vsub.f32 %v689, %v859
    %v892 = vsub.f32 %v694, %v860
    %v893 = vsub.f32 %v699, %v861
    %v894 = vsub.f32 %v704, %v862
    %v895 = vsub.f32 %v709, %v863
    %v896 = vsub.f32 %v714, %v864
    %v897 = vsub.f32 %v719, %v865
    %v898 = vsub.f32 %v724, %v866
    %v899 = vsub.f32 %v729, %v867
    %v900 = vsub.f32 %v734, %v868
    %v901 = vsub.f32 %v739, %v869
    %v902 = vsub.f32 %v744, %v870
    %v903 = vsub.f32 %v749, %v871
    %v904 = vsub.f32 %v754, %v872
    %v905 = vsub.f32 %v759, %v873
    %v906 = vsub.f32 %v764, %v874
    %v907 = vsub.f32 %v769, %v875
    %v908 = vsub.f32 %v774, %v876
    %v909 = vsub.f32 %v779, %v877
    %v910 = vmul.f32 %v878, %v878
    %v911 = vmul.f32 %v879, %v879
    %v912 = vmul.f32 %v880, %v880
    %v913 = vmul.f32 %v881, %v881
    %v914 = vmul.f32 %v882, %v882
    %v915 = vmul.f32 %v883, %v883
    %v916 = vmul.f32 %v884, %v884
    %v917 = vmul.f32 %v885, %v885
    %v918 = vmul.f32 %v886, %v886
    %v919 = vmul.f32 %v887, %v887
    %v920 = vmul.f32 %v888, %v888
    %v921 = vmul.f32 %v889, %v889
    %v922 = vmul.f32 %v890, %v890
    %v923 = vmul.f32 %v891, %v891
    %v924 = vmul.f32 %v892, %v892
    %v925 = vmul.f32 %v893, %v893
    %v926 = vmul.f32 %v894, %v894
    %v927 = vmul.f32 %v895, %v895
    %v928 = vmul.f32 %v896, %v896
    %v929 = vmul.f32 %v897, %v897
    %v930 = vmul.f32 %v898, %v898
    %v931 = vmul.f32 %v899, %v899
    %v932 = vmul.f32 %v900, %v900
    %v933 = vmul.f32 %v901, %v901
    %v934 = vmul.f32 %v902, %v902
    %v935 = vmul.f32 %v903, %v903
    %v936 = vmul.f32 %v904, %v904
    %v937 = vmul.f32 %v905, %v905
    %v938 = vmul.f32 %v906, %v906
    %v939 = vmul.f32 %v907, %v907
    %v940 = vmul.f32 %v908, %v908
    %v941 = vmul.f32 %v909, %v909
    %942 = vadd.xlane.f32.xlu0 %v910
    %v943 = vpop.xlane.xlu0 %942
    %944 = vadd.xlane.f32.xlu0 %v911
    %v945 = vpop.xlane.xlu0 %944
    %946 = vadd.xlane.f32.xlu0 %v912
    %v947 = vpop.xlane.xlu0 %946
    %948 = vadd.xlane.f32.xlu0 %v913
    %v949 = vpop.xlane.xlu0 %948
    %950 = vadd.xlane.f32.xlu0 %v914
    %v951 = vpop.xlane.xlu0 %950
    %952 = vadd.xlane.f32.xlu0 %v915
    %v953 = vpop.xlane.xlu0 %952
    %954 = vadd.xlane.f32.xlu0 %v916
    %v955 = vpop.xlane.xlu0 %954
    %956 = vadd.xlane.f32.xlu0 %v917
    %v957 = vpop.xlane.xlu0 %956
    %958 = vadd.xlane.f32.xlu0 %v918
    %v959 = vpop.xlane.xlu0 %958
    %960 = vadd.xlane.f32.xlu0 %v919
    %v961 = vpop.xlane.xlu0 %960
    %962 = vadd.xlane.f32.xlu0 %v920
    %v963 = vpop.xlane.xlu0 %962
    %964 = vadd.xlane.f32.xlu0 %v921
    %v965 = vpop.xlane.xlu0 %964
    %966 = vadd.xlane.f32.xlu0 %v922
    %v967 = vpop.xlane.xlu0 %966
    %968 = vadd.xlane.f32.xlu0 %v923
    %v969 = vpop.xlane.xlu0 %968
    %970 = vadd.xlane.f32.xlu0 %v924
    %v971 = vpop.xlane.xlu0 %970
    %972 = vadd.xlane.f32.xlu0 %v925
    %v973 = vpop.xlane.xlu0 %972
    %974 = vadd.xlane.f32.xlu0 %v926
    %v975 = vpop.xlane.xlu0 %974
    %976 = vadd.xlane.f32.xlu0 %v927
    %v977 = vpop.xlane.xlu0 %976
    %978 = vadd.xlane.f32.xlu0 %v928
    %v979 = vpop.xlane.xlu0 %978
    %980 = vadd.xlane.f32.xlu0 %v929
    %v981 = vpop.xlane.xlu0 %980
    %982 = vadd.xlane.f32.xlu0 %v930
    %v983 = vpop.xlane.xlu0 %982
    %984 = vadd.xlane.f32.xlu0 %v931
    %v985 = vpop.xlane.xlu0 %984
    %986 = vadd.xlane.f32.xlu0 %v932
    %v987 = vpop.xlane.xlu0 %986
    %988 = vadd.xlane.f32.xlu0 %v933
    %v989 = vpop.xlane.xlu0 %988
    %990 = vadd.xlane.f32.xlu0 %v934
    %v991 = vpop.xlane.xlu0 %990
    %992 = vadd.xlane.f32.xlu0 %v935
    %v993 = vpop.xlane.xlu0 %992
    %994 = vadd.xlane.f32.xlu0 %v936
    %v995 = vpop.xlane.xlu0 %994
    %996 = vadd.xlane.f32.xlu0 %v937
    %v997 = vpop.xlane.xlu0 %996
    %998 = vadd.xlane.f32.xlu0 %v938
    %v999 = vpop.xlane.xlu0 %998
    %1000 = vadd.xlane.f32.xlu0 %v939
    %v1001 = vpop.xlane.xlu0 %1000
    %1002 = vadd.xlane.f32.xlu0 %v940
    %v1003 = vpop.xlane.xlu0 %1002
    %1004 = vadd.xlane.f32.xlu0 %v941
    %v1005 = vpop.xlane.xlu0 %1004
    %v1006 = vmul.f32 %v943, %v167
    %v1007 = vmul.f32 %v945, %v167
    %v1008 = vmul.f32 %v947, %v167
    %v1009 = vmul.f32 %v949, %v167
    %v1010 = vmul.f32 %v951, %v167
    %v1011 = vmul.f32 %v953, %v167
    %v1012 = vmul.f32 %v955, %v167
    %v1013 = vmul.f32 %v957, %v167
    %v1014 = vmul.f32 %v959, %v167
    %v1015 = vmul.f32 %v961, %v167
    %v1016 = vmul.f32 %v963, %v167
    %v1017 = vmul.f32 %v965, %v167
    %v1018 = vmul.f32 %v967, %v167
    %v1019 = vmul.f32 %v969, %v167
    %v1020 = vmul.f32 %v971, %v167
    %v1021 = vmul.f32 %v973, %v167
    %v1022 = vmul.f32 %v975, %v167
    %v1023 = vmul.f32 %v977, %v167
    %v1024 = vmul.f32 %v979, %v167
    %v1025 = vmul.f32 %v981, %v167
    %v1026 = vmul.f32 %v983, %v167
    %v1027 = vmul.f32 %v985, %v167
    %v1028 = vmul.f32 %v987, %v167
    %v1029 = vmul.f32 %v989, %v167
    %v1030 = vmul.f32 %v991, %v167
    %v1031 = vmul.f32 %v993, %v167
    %v1032 = vmul.f32 %v995, %v167
    %v1033 = vmul.f32 %v997, %v167
    %v1034 = vmul.f32 %v999, %v167
    %v1035 = vmul.f32 %v1001, %v167
    %v1036 = vmul.f32 %v1003, %v167
    %v1037 = vmul.f32 %v1005, %v167
    %v1038 = vadd.f32 %v1006, 1e-05
    %v1039 = vadd.f32 %v1007, 1e-05
    %v1040 = vadd.f32 %v1008, 1e-05
    %v1041 = vadd.f32 %v1009, 1e-05
    %v1042 = vadd.f32 %v1010, 1e-05
    %v1043 = vadd.f32 %v1011, 1e-05
    %v1044 = vadd.f32 %v1012, 1e-05
    %v1045 = vadd.f32 %v1013, 1e-05
    %v1046 = vadd.f32 %v1014, 1e-05
    %v1047 = vadd.f32 %v1015, 1e-05
    %v1048 = vadd.f32 %v1016, 1e-05
    %v1049 = vadd.f32 %v1017, 1e-05
    %v1050 = vadd.f32 %v1018, 1e-05
    %v1051 = vadd.f32 %v1019, 1e-05
    %v1052 = vadd.f32 %v1020, 1e-05
    %v1053 = vadd.f32 %v1021, 1e-05
    %v1054 = vadd.f32 %v1022, 1e-05
    %v1055 = vadd.f32 %v1023, 1e-05
    %v1056 = vadd.f32 %v1024, 1e-05
    %v1057 = vadd.f32 %v1025, 1e-05
    %v1058 = vadd.f32 %v1026, 1e-05
    %v1059 = vadd.f32 %v1027, 1e-05
    %v1060 = vadd.f32 %v1028, 1e-05
    %v1061 = vadd.f32 %v1029, 1e-05
    %v1062 = vadd.f32 %v1030, 1e-05
    %v1063 = vadd.f32 %v1031, 1e-05
    %v1064 = vadd.f32 %v1032, 1e-05
    %v1065 = vadd.f32 %v1033, 1e-05
    %v1066 = vadd.f32 %v1034, 1e-05
    %v1067 = vadd.f32 %v1035, 1e-05
    %v1068 = vadd.f32 %v1036, 1e-05
    %v1069 = vadd.f32 %v1037, 1e-05
    %v1070 = vrsqrt.pop %v1038
    %v1071 = vrsqrt.pop %v1039
    %v1072 = vrsqrt.pop %v1040
    %v1073 = vrsqrt.pop %v1041
    %v1074 = vrsqrt.pop %v1042
    %v1075 = vrsqrt.pop %v1043
    %v1076 = vrsqrt.pop %v1044
    %v1077 = vrsqrt.pop %v1045
    %v1078 = vrsqrt.pop %v1046
    %v1079 = vrsqrt.pop %v1047
    %v1080 = vrsqrt.pop %v1048
    %v1081 = vrsqrt.pop %v1049
    %v1082 = vrsqrt.pop %v1050
    %v1083 = vrsqrt.pop %v1051
    %v1084 = vrsqrt.pop %v1052
    %v1085 = vrsqrt.pop %v1053
    %v1086 = vrsqrt.pop %v1054
    %v1087 = vrsqrt.pop %v1055
    %v1088 = vrsqrt.pop %v1056
    %v1089 = vrsqrt.pop %v1057
    %v1090 = vrsqrt.pop %v1058
    %v1091 = vrsqrt.pop %v1059
    %v1092 = vrsqrt.pop %v1060
    %v1093 = vrsqrt.pop %v1061
    %v1094 = vrsqrt.pop %v1062
    %v1095 = vrsqrt.pop %v1063
    %v1096 = vrsqrt.pop %v1064
    %v1097 = vrsqrt.pop %v1065
    %v1098 = vrsqrt.pop %v1066
    %v1099 = vrsqrt.pop %v1067
    %v1100 = vrsqrt.pop %v1068
    %v1101 = vrsqrt.pop %v1069
    %v1102 = vmul.f32 %v878, %v1070
    %v1103 = vmul.f32 %v879, %v1071
    %v1104 = vmul.f32 %v880, %v1072
    %v1105 = vmul.f32 %v881, %v1073
    %v1106 = vmul.f32 %v882, %v1074
    %v1107 = vmul.f32 %v883, %v1075
    %v1108 = vmul.f32 %v884, %v1076
    %v1109 = vmul.f32 %v885, %v1077
    %v1110 = vmul.f32 %v886, %v1078
    %v1111 = vmul.f32 %v887, %v1079
    %v1112 = vmul.f32 %v888, %v1080
    %v1113 = vmul.f32 %v889, %v1081
    %v1114 = vmul.f32 %v890, %v1082
    %v1115 = vmul.f32 %v891, %v1083
    %v1116 = vmul.f32 %v892, %v1084
    %v1117 = vmul.f32 %v893, %v1085
    %v1118 = vmul.f32 %v894, %v1086
    %v1119 = vmul.f32 %v895, %v1087
    %v1120 = vmul.f32 %v896, %v1088
    %v1121 = vmul.f32 %v897, %v1089
    %v1122 = vmul.f32 %v898, %v1090
    %v1123 = vmul.f32 %v899, %v1091
    %v1124 = vmul.f32 %v900, %v1092
    %v1125 = vmul.f32 %v901, %v1093
    %v1126 = vmul.f32 %v902, %v1094
    %v1127 = vmul.f32 %v903, %v1095
    %v1128 = vmul.f32 %v904, %v1096
    %v1129 = vmul.f32 %v905, %v1097
    %v1130 = vmul.f32 %v906, %v1098
    %v1131 = vmul.f32 %v907, %v1099
    %v1132 = vmul.f32 %v908, %v1100
    %v1133 = vmul.f32 %v909, %v1101
    %v1134 = vld [vmem:[%s5] sm:$0x1]
    %v1136 = vlaneseq
    %v1137 = vshrl.u32 %v1136, 7
    %v1138 = vsub.s32 0, %v1137
    %v1139 = vrot.slane %v1134, %v1138
    %v1141 = vmul.f32 %v1102, %v1139
    %v1142 = vmul.f32 %v1103, %v1139
    %v1143 = vmul.f32 %v1104, %v1139
    %v1144 = vmul.f32 %v1105, %v1139
    %v1145 = vmul.f32 %v1106, %v1139
    %v1146 = vmul.f32 %v1107, %v1139
    %v1147 = vmul.f32 %v1108, %v1139
    %v1148 = vmul.f32 %v1109, %v1139
    %v1149 = vmul.f32 %v1110, %v1139
    %v1150 = vmul.f32 %v1111, %v1139
    %v1151 = vmul.f32 %v1112, %v1139
    %v1152 = vmul.f32 %v1113, %v1139
    %v1153 = vmul.f32 %v1114, %v1139
    %v1154 = vmul.f32 %v1115, %v1139
    %v1155 = vmul.f32 %v1116, %v1139
    %v1156 = vmul.f32 %v1117, %v1139
    %v1157 = vmul.f32 %v1118, %v1139
    %v1158 = vmul.f32 %v1119, %v1139
    %v1159 = vmul.f32 %v1120, %v1139
    %v1160 = vmul.f32 %v1121, %v1139
    %v1161 = vmul.f32 %v1122, %v1139
    %v1162 = vmul.f32 %v1123, %v1139
    %v1163 = vmul.f32 %v1124, %v1139
    %v1164 = vmul.f32 %v1125, %v1139
    %v1165 = vmul.f32 %v1126, %v1139
    %v1166 = vmul.f32 %v1127, %v1139
    %v1167 = vmul.f32 %v1128, %v1139
    %v1168 = vmul.f32 %v1129, %v1139
    %v1169 = vmul.f32 %v1130, %v1139
    %v1170 = vmul.f32 %v1131, %v1139
    %v1171 = vmul.f32 %v1132, %v1139
    %v1172 = vmul.f32 %v1133, %v1139
    %v1173 = vld [vmem:[%s6] sm:$0x1]
    %v1175 = vlaneseq
    %v1176 = vshrl.u32 %v1175, 7
    %v1177 = vsub.s32 0, %v1176
    %v1178 = vrot.slane %v1173, %v1177
    %v1180 = vadd.f32 %v1141, %v1178
    %v1181 = vadd.f32 %v1142, %v1178
    %v1182 = vadd.f32 %v1143, %v1178
    %v1183 = vadd.f32 %v1144, %v1178
    %v1184 = vadd.f32 %v1145, %v1178
    %v1185 = vadd.f32 %v1146, %v1178
    %v1186 = vadd.f32 %v1147, %v1178
    %v1187 = vadd.f32 %v1148, %v1178
    %v1188 = vadd.f32 %v1149, %v1178
    %v1189 = vadd.f32 %v1150, %v1178
    %v1190 = vadd.f32 %v1151, %v1178
    %v1191 = vadd.f32 %v1152, %v1178
    %v1192 = vadd.f32 %v1153, %v1178
    %v1193 = vadd.f32 %v1154, %v1178
    %v1194 = vadd.f32 %v1155, %v1178
    %v1195 = vadd.f32 %v1156, %v1178
    %v1196 = vadd.f32 %v1157, %v1178
    %v1197 = vadd.f32 %v1158, %v1178
    %v1198 = vadd.f32 %v1159, %v1178
    %v1199 = vadd.f32 %v1160, %v1178
    %v1200 = vadd.f32 %v1161, %v1178
    %v1201 = vadd.f32 %v1162, %v1178
    %v1202 = vadd.f32 %v1163, %v1178
    %v1203 = vadd.f32 %v1164, %v1178
    %v1204 = vadd.f32 %v1165, %v1178
    %v1205 = vadd.f32 %v1166, %v1178
    %v1206 = vadd.f32 %v1167, %v1178
    %v1207 = vadd.f32 %v1168, %v1178
    %v1208 = vadd.f32 %v1169, %v1178
    %v1209 = vadd.f32 %v1170, %v1178
    %v1210 = vadd.f32 %v1171, %v1178
    %v1211 = vadd.f32 %v1172, %v1178
    %v1212 = vmax.f32 %v1180, 0.0
    %v1213 = vmax.f32 %v1181, 0.0
    %v1214 = vmax.f32 %v1182, 0.0
    %v1215 = vmax.f32 %v1183, 0.0
    %v1216 = vmax.f32 %v1184, 0.0
    %v1217 = vmax.f32 %v1185, 0.0
    %v1218 = vmax.f32 %v1186, 0.0
    %v1219 = vmax.f32 %v1187, 0.0
    %v1220 = vmax.f32 %v1188, 0.0
    %v1221 = vmax.f32 %v1189, 0.0
    %v1222 = vmax.f32 %v1190, 0.0
    %v1223 = vmax.f32 %v1191, 0.0
    %v1224 = vmax.f32 %v1192, 0.0
    %v1225 = vmax.f32 %v1193, 0.0
    %v1226 = vmax.f32 %v1194, 0.0
    %v1227 = vmax.f32 %v1195, 0.0
    %v1228 = vmax.f32 %v1196, 0.0
    %v1229 = vmax.f32 %v1197, 0.0
    %v1230 = vmax.f32 %v1198, 0.0
    %v1231 = vmax.f32 %v1199, 0.0
    %v1232 = vmax.f32 %v1200, 0.0
    %v1233 = vmax.f32 %v1201, 0.0
    %v1234 = vmax.f32 %v1202, 0.0
    %v1235 = vmax.f32 %v1203, 0.0
    %v1236 = vmax.f32 %v1204, 0.0
    %v1237 = vmax.f32 %v1205, 0.0
    %v1238 = vmax.f32 %v1206, 0.0
    %v1239 = vmax.f32 %v1207, 0.0
    %v1240 = vmax.f32 %v1208, 0.0
    %v1241 = vmax.f32 %v1209, 0.0
    %v1242 = vmax.f32 %v1210, 0.0
    %v1243 = vmax.f32 %v1211, 0.0
    %v1244 = vld [vmem:[#allocation7] sm:$0xff]
    %v1245 = vld [vmem:[#allocation7 + $0x8] sm:$0xff]
    %v1246 = vld [vmem:[#allocation7 + $0x10] sm:$0xff]
    %v1247 = vld [vmem:[#allocation7 + $0x18] sm:$0xff]
    %v1248 = vld [vmem:[#allocation7 + $0x20] sm:$0xff]
    %v1249 = vld [vmem:[#allocation7 + $0x28] sm:$0xff]
    %v1250 = vld [vmem:[#allocation7 + $0x30] sm:$0xff]
    %v1251 = vld [vmem:[#allocation7 + $0x38] sm:$0xff]
    %v1252 = vld [vmem:[#allocation7 + $0x40] sm:$0xff]
    %v1253 = vld [vmem:[#allocation7 + $0x48] sm:$0xff]
    %v1254 = vld [vmem:[#allocation7 + $0x50] sm:$0xff]
    %v1255 = vld [vmem:[#allocation7 + $0x58] sm:$0xff]
    %v1256 = vld [vmem:[#allocation7 + $0x60] sm:$0xff]
    %v1257 = vld [vmem:[#allocation7 + $0x68] sm:$0xff]
    %v1258 = vld [vmem:[#allocation7 + $0x70] sm:$0xff]
    %v1259 = vld [vmem:[#allocation7 + $0x78] sm:$0xff]
    %1260 = vmatprep.subr.mxu0 0.0
    %1261 = vmatpush1.msra.mxu0 %v1259
    %1262 = vmatprep.subr.mxu0 0.0
    %1263 = vmatpush1.msra.mxu0 %v1258
    %1264 = vmatprep.subr.mxu0 0.0
    %1265 = vmatpush1.msra.mxu0 %v1257
    %1266 = vmatprep.subr.mxu0 0.0
    %1267 = vmatpush1.msra.mxu0 %v1256
    %1268 = vmatprep.subr.mxu0 0.0
    %1269 = vmatpush1.msra.mxu0 %v1255
    %1270 = vmatprep.subr.mxu0 0.0
    %1271 = vmatpush1.msra.mxu0 %v1254
    %1272 = vmatprep.subr.mxu0 0.0
    %1273 = vmatpush1.msra.mxu0 %v1253
    %1274 = vmatprep.subr.mxu0 0.0
    %1275 = vmatpush1.msra.mxu0 %v1252
    %1276 = vmatprep.subr.mxu0 0.0
    %1277 = vmatpush1.msra.mxu0 %v1251
    %1278 = vmatprep.subr.mxu0 0.0
    %1279 = vmatpush1.msra.mxu0 %v1250
    %1280 = vmatprep.subr.mxu0 0.0
    %1281 = vmatpush1.msra.mxu0 %v1249
    %1282 = vmatprep.subr.mxu0 0.0
    %1283 = vmatpush1.msra.mxu0 %v1248
    %1284 = vmatprep.subr.mxu0 0.0
    %1285 = vmatpush1.msra.mxu0 %v1247
    %1286 = vmatprep.subr.mxu0 0.0
    %1287 = vmatpush1.msra.mxu0 %v1246
    %1288 = vmatprep.subr.mxu0 0.0
    %1289 = vmatpush1.msra.mxu0 %v1245
    %1290 = vmatprep.subr.mxu0 0.0
    %1291 = vmatpush1.msra.mxu0 %v1244
    %1292 = vmatprep.subr.mxu0 0.0
    %1293 = vmatpush2.msra.mxu0 0.0
    %1294 = vmatprep.subr.mxu0 0.0
    %1295 = vmatpush2.msra.mxu0 0.0
    %1296 = vmatprep.subr.mxu0 0.0
    %1297 = vmatpush2.msra.mxu0 0.0
    %1298 = vmatprep.subr.mxu0 0.0
    %1299 = vmatpush2.msra.mxu0 0.0
    %1300 = vmatprep.subr.mxu0 0.0
    %1301 = vmatpush2.msra.mxu0 0.0
    %1302 = vmatprep.subr.mxu0 0.0
    %1303 = vmatpush2.msra.mxu0 0.0
    %1304 = vmatprep.subr.mxu0 0.0
    %1305 = vmatpush2.msra.mxu0 0.0
    %1306 = vmatprep.subr.mxu0 0.0
    %1307 = vmatpush2.msra.mxu0 0.0
    %1308 = vmatprep.subr.mxu0 0.0
    %1309 = vmatpush2.msra.mxu0 0.0
    %1310 = vmatprep.subr.mxu0 0.0
    %1311 = vmatpush2.msra.mxu0 0.0
    %1312 = vmatprep.subr.mxu0 0.0
    %1313 = vmatpush2.msra.mxu0 0.0
    %1314 = vmatprep.subr.mxu0 0.0
    %1315 = vmatpush2.msra.mxu0 0.0
    %1316 = vmatprep.subr.mxu0 0.0
    %1317 = vmatpush2.msra.mxu0 0.0
    %1318 = vmatprep.subr.mxu0 0.0
    %1319 = vmatpush2.msra.mxu0 0.0
    %1320 = vmatprep.subr.mxu0 0.0
    %1321 = vmatpush2.msra.mxu0 0.0
    %1322 = vmatprep.subr.mxu0 0.0
    %1323 = vmatpush2.msra.mxu0 0.0
    %1324 = vmatprep.mubr.f32.mxu0 0.0
    %1325 = vmatmul.mubr.f32.gmra.mxu0 %v1212
    %v1326 = vpop.f32.mrf.mxu0
    %v1327 = vadd.f32 0.0, %v1326
    %v1328 = vpop.f32.mrf.mxu0
    %1329 = vmatprep.mubr.f32.mxu0 0.0
    %1330 = vmatmul.mubr.f32.gmra.mxu0 %v1213
    %v1331 = vpop.f32.mrf.mxu0
    %v1332 = vadd.f32 0.0, %v1331
    %v1333 = vpop.f32.mrf.mxu0
    %1334 = vmatprep.mubr.f32.mxu0 0.0
    %1335 = vmatmul.mubr.f32.gmra.mxu0 %v1214
    %v1336 = vpop.f32.mrf.mxu0
    %v1337 = vadd.f32 0.0, %v1336
    %v1338 = vpop.f32.mrf.mxu0
    %1339 = vmatprep.mubr.f32.mxu0 0.0
    %1340 = vmatmul.mubr.f32.gmra.mxu0 %v1215
    %v1341 = vpop.f32.mrf.mxu0
    %v1342 = vadd.f32 0.0, %v1341
    %v1343 = vpop.f32.mrf.mxu0
    %1344 = vmatprep.mubr.f32.mxu0 0.0
    %1345 = vmatmul.mubr.f32.gmra.mxu0 %v1216
    %v1346 = vpop.f32.mrf.mxu0
    %v1347 = vadd.f32 0.0, %v1346
    %v1348 = vpop.f32.mrf.mxu0
    %1349 = vmatprep.mubr.f32.mxu0 0.0
    %1350 = vmatmul.mubr.f32.gmra.mxu0 %v1217
    %v1351 = vpop.f32.mrf.mxu0
    %v1352 = vadd.f32 0.0, %v1351
    %v1353 = vpop.f32.mrf.mxu0
    %1354 = vmatprep.mubr.f32.mxu0 0.0
    %1355 = vmatmul.mubr.f32.gmra.mxu0 %v1218
    %v1356 = vpop.f32.mrf.mxu0
    %v1357 = vadd.f32 0.0, %v1356
    %v1358 = vpop.f32.mrf.mxu0
    %1359 = vmatprep.mubr.f32.mxu0 0.0
    %1360 = vmatmul.mubr.f32.gmra.mxu0 %v1219
    %v1361 = vpop.f32.mrf.mxu0
    %v1362 = vadd.f32 0.0, %v1361
    %v1363 = vpop.f32.mrf.mxu0
    %1364 = vmatprep.mubr.f32.mxu0 0.0
    %1365 = vmatmul.mubr.f32.gmra.mxu0 %v1220
    %v1366 = vpop.f32.mrf.mxu0
    %v1367 = vadd.f32 0.0, %v1366
    %v1368 = vpop.f32.mrf.mxu0
    %1369 = vmatprep.mubr.f32.mxu0 0.0
    %1370 = vmatmul.mubr.f32.gmra.mxu0 %v1221
    %v1371 = vpop.f32.mrf.mxu0
    %v1372 = vadd.f32 0.0, %v1371
    %v1373 = vpop.f32.mrf.mxu0
    %1374 = vmatprep.mubr.f32.mxu0 0.0
    %1375 = vmatmul.mubr.f32.gmra.mxu0 %v1222
    %v1376 = vpop.f32.mrf.mxu0
    %v1377 = vadd.f32 0.0, %v1376
    %v1378 = vpop.f32.mrf.mxu0
    %1379 = vmatprep.mubr.f32.mxu0 0.0
    %1380 = vmatmul.mubr.f32.gmra.mxu0 %v1223
    %v1381 = vpop.f32.mrf.mxu0
    %v1382 = vadd.f32 0.0, %v1381
    %v1383 = vpop.f32.mrf.mxu0
    %1384 = vmatprep.mubr.f32.mxu0 0.0
    %1385 = vmatmul.mubr.f32.gmra.mxu0 %v1224
    %v1386 = vpop.f32.mrf.mxu0
    %v1387 = vadd.f32 0.0, %v1386
    %v1388 = vpop.f32.mrf.mxu0
    %1389 = vmatprep.mubr.f32.mxu0 0.0
    %1390 = vmatmul.mubr.f32.gmra.mxu0 %v1225
    %v1391 = vpop.f32.mrf.mxu0
    %v1392 = vadd.f32 0.0, %v1391
    %v1393 = vpop.f32.mrf.mxu0
    %1394 = vmatprep.mubr.f32.mxu0 0.0
    %1395 = vmatmul.mubr.f32.gmra.mxu0 %v1226
    %v1396 = vpop.f32.mrf.mxu0
    %v1397 = vadd.f32 0.0, %v1396
    %v1398 = vpop.f32.mrf.mxu0
    %1399 = vmatprep.mubr.f32.mxu0 0.0
    %1400 = vmatmul.mubr.f32.gmra.mxu0 %v1227
    %v1401 = vpop.f32.mrf.mxu0
    %v1402 = vadd.f32 0.0, %v1401
    %v1403 = vpop.f32.mrf.mxu0
    %1404 = vmatprep.mubr.f32.mxu0 0.0
    %1405 = vmatmul.mubr.f32.gmra.mxu0 %v1228
    %v1406 = vpop.f32.mrf.mxu0
    %v1407 = vadd.f32 0.0, %v1406
    %v1408 = vpop.f32.mrf.mxu0
    %1409 = vmatprep.mubr.f32.mxu0 0.0
    %1410 = vmatmul.mubr.f32.gmra.mxu0 %v1229
    %v1411 = vpop.f32.mrf.mxu0
    %v1412 = vadd.f32 0.0, %v1411
    %v1413 = vpop.f32.mrf.mxu0
    %1414 = vmatprep.mubr.f32.mxu0 0.0
    %1415 = vmatmul.mubr.f32.gmra.mxu0 %v1230
    %v1416 = vpop.f32.mrf.mxu0
    %v1417 = vadd.f32 0.0, %v1416
    %v1418 = vpop.f32.mrf.mxu0
    %1419 = vmatprep.mubr.f32.mxu0 0.0
    %1420 = vmatmul.mubr.f32.gmra.mxu0 %v1231
    %v1421 = vpop.f32.mrf.mxu0
    %v1422 = vadd.f32 0.0, %v1421
    %v1423 = vpop.f32.mrf.mxu0
    %1424 = vmatprep.mubr.f32.mxu0 0.0
    %1425 = vmatmul.mubr.f32.gmra.mxu0 %v1232
    %v1426 = vpop.f32.mrf.mxu0
    %v1427 = vadd.f32 0.0, %v1426
    %v1428 = vpop.f32.mrf.mxu0
    %1429 = vmatprep.mubr.f32.mxu0 0.0
    %1430 = vmatmul.mubr.f32.gmra.mxu0 %v1233
    %v1431 = vpop.f32.mrf.mxu0
    %v1432 = vadd.f32 0.0, %v1431
    %v1433 = vpop.f32.mrf.mxu0
    %1434 = vmatprep.mubr.f32.mxu0 0.0
    %1435 = vmatmul.mubr.f32.gmra.mxu0 %v1234
    %v1436 = vpop.f32.mrf.mxu0
    %v1437 = vadd.f32 0.0, %v1436
    %v1438 = vpop.f32.mrf.mxu0
    %1439 = vmatprep.mubr.f32.mxu0 0.0
    %1440 = vmatmul.mubr.f32.gmra.mxu0 %v1235
    %v1441 = vpop.f32.mrf.mxu0
    %v1442 = vadd.f32 0.0, %v1441
    %v1443 = vpop.f32.mrf.mxu0
    %1444 = vmatprep.mubr.f32.mxu0 0.0
    %1445 = vmatmul.mubr.f32.gmra.mxu0 %v1236
    %v1446 = vpop.f32.mrf.mxu0
    %v1447 = vadd.f32 0.0, %v1446
    %v1448 = vpop.f32.mrf.mxu0
    %1449 = vmatprep.mubr.f32.mxu0 0.0
    %1450 = vmatmul.mubr.f32.gmra.mxu0 %v1237
    %v1451 = vpop.f32.mrf.mxu0
    %v1452 = vadd.f32 0.0, %v1451
    %v1453 = vpop.f32.mrf.mxu0
    %1454 = vmatprep.mubr.f32.mxu0 0.0
    %1455 = vmatmul.mubr.f32.gmra.mxu0 %v1238
    %v1456 = vpop.f32.mrf.mxu0
    %v1457 = vadd.f32 0.0, %v1456
    %v1458 = vpop.f32.mrf.mxu0
    %1459 = vmatprep.mubr.f32.mxu0 0.0
    %1460 = vmatmul.mubr.f32.gmra.mxu0 %v1239
    %v1461 = vpop.f32.mrf.mxu0
    %v1462 = vadd.f32 0.0, %v1461
    %v1463 = vpop.f32.mrf.mxu0
    %1464 = vmatprep.mubr.f32.mxu0 0.0
    %1465 = vmatmul.mubr.f32.gmra.mxu0 %v1240
    %v1466 = vpop.f32.mrf.mxu0
    %v1467 = vadd.f32 0.0, %v1466
    %v1468 = vpop.f32.mrf.mxu0
    %1469 = vmatprep.mubr.f32.mxu0 0.0
    %1470 = vmatmul.mubr.f32.gmra.mxu0 %v1241
    %v1471 = vpop.f32.mrf.mxu0
    %v1472 = vadd.f32 0.0, %v1471
    %v1473 = vpop.f32.mrf.mxu0
    %1474 = vmatprep.mubr.f32.mxu0 0.0
    %1475 = vmatmul.mubr.f32.gmra.mxu0 %v1242
    %v1476 = vpop.f32.mrf.mxu0
    %v1477 = vadd.f32 0.0, %v1476
    %v1478 = vpop.f32.mrf.mxu0
    %1479 = vmatprep.mubr.f32.mxu0 0.0
    %1480 = vmatmul.mubr.f32.gmra.mxu0 %v1243
    %v1481 = vpop.f32.mrf.mxu0
    %v1482 = vadd.f32 0.0, %v1481
    %v1483 = vpop.f32.mrf.mxu0
    %1484 = vdwg.mxu0
    %v1485 = vmul.f32 %v1327, 1.442695
    %v1486 = vpow.pop %v1485
    %v1487 = vmul.f32 %v1332, 1.442695
    %v1488 = vpow.pop %v1487
    %v1489 = vmul.f32 %v1337, 1.442695
    %v1490 = vpow.pop %v1489
    %v1491 = vmul.f32 %v1342, 1.442695
    %v1492 = vpow.pop %v1491
    %v1493 = vmul.f32 %v1347, 1.442695
    %v1494 = vpow.pop %v1493
    %v1495 = vmul.f32 %v1352, 1.442695
    %v1496 = vpow.pop %v1495
    %v1497 = vmul.f32 %v1357, 1.442695
    %v1498 = vpow.pop %v1497
    %v1499 = vmul.f32 %v1362, 1.442695
    %v1500 = vpow.pop %v1499
    %v1501 = vmul.f32 %v1367, 1.442695
    %v1502 = vpow.pop %v1501
    %v1503 = vmul.f32 %v1372, 1.442695
    %v1504 = vpow.pop %v1503
    %v1505 = vmul.f32 %v1377, 1.442695
    %v1506 = vpow.pop %v1505
    %v1507 = vmul.f32 %v1382, 1.442695
    %v1508 = vpow.pop %v1507
    %v1509 = vmul.f32 %v1387, 1.442695
    %v1510 = vpow.pop %v1509
    %v1511 = vmul.f32 %v1392, 1.442695
    %v1512 = vpow.pop %v1511
    %v1513 = vmul.f32 %v1397, 1.442695
    %v1514 = vpow.pop %v1513
    %v1515 = vmul.f32 %v1402, 1.442695
    %v1516 = vpow.pop %v1515
    %v1517 = vmul.f32 %v1407, 1.442695
    %v1518 = vpow.pop %v1517
    %v1519 = vmul.f32 %v1412, 1.442695
    %v1520 = vpow.pop %v1519
    %v1521 = vmul.f32 %v1417, 1.442695
    %v1522 = vpow.pop %v1521
    %v1523 = vmul.f32 %v1422, 1.442695
    %v1524 = vpow.pop %v1523
    %v1525 = vmul.f32 %v1427, 1.442695
    %v1526 = vpow.pop %v1525
    %v1527 = vmul.f32 %v1432, 1.442695
    %v1528 = vpow.pop %v1527
    %v1529 = vmul.f32 %v1437, 1.442695
    %v1530 = vpow.pop %v1529
    %v1531 = vmul.f32 %v1442, 1.442695
    %v1532 = vpow.pop %v1531
    %v1533 = vmul.f32 %v1447, 1.442695
    %v1534 = vpow.pop %v1533
    %v1535 = vmul.f32 %v1452, 1.442695
    %v1536 = vpow.pop %v1535
    %v1537 = vmul.f32 %v1457, 1.442695
    %v1538 = vpow.pop %v1537
    %v1539 = vmul.f32 %v1462, 1.442695
    %v1540 = vpow.pop %v1539
    %v1541 = vmul.f32 %v1467, 1.442695
    %v1542 = vpow.pop %v1541
    %v1543 = vmul.f32 %v1472, 1.442695
    %v1544 = vpow.pop %v1543
    %v1545 = vmul.f32 %v1477, 1.442695
    %v1546 = vpow.pop %v1545
    %v1547 = vmul.f32 %v1482, 1.442695
    %v1548 = vpow.pop %v1547
    %v1549 = vmax.f32 %v1486, 1e-05
    %v1550 = vmax.f32 %v1488, 1e-05
    %v1551 = vmax.f32 %v1490, 1e-05
    %v1552 = vmax.f32 %v1492, 1e-05
    %v1553 = vmax.f32 %v1494, 1e-05
    %v1554 = vmax.f32 %v1496, 1e-05
    %v1555 = vmax.f32 %v1498, 1e-05
    %v1556 = vmax.f32 %v1500, 1e-05
    %v1557 = vmax.f32 %v1502, 1e-05
    %v1558 = vmax.f32 %v1504, 1e-05
    %v1559 = vmax.f32 %v1506, 1e-05
    %v1560 = vmax.f32 %v1508, 1e-05
    %v1561 = vmax.f32 %v1510, 1e-05
    %v1562 = vmax.f32 %v1512, 1e-05
    %v1563 = vmax.f32 %v1514, 1e-05
    %v1564 = vmax.f32 %v1516, 1e-05
    %v1565 = vmax.f32 %v1518, 1e-05
    %v1566 = vmax.f32 %v1520, 1e-05
    %v1567 = vmax.f32 %v1522, 1e-05
    %v1568 = vmax.f32 %v1524, 1e-05
    %v1569 = vmax.f32 %v1526, 1e-05
    %v1570 = vmax.f32 %v1528, 1e-05
    %v1571 = vmax.f32 %v1530, 1e-05
    %v1572 = vmax.f32 %v1532, 1e-05
    %v1573 = vmax.f32 %v1534, 1e-05
    %v1574 = vmax.f32 %v1536, 1e-05
    %v1575 = vmax.f32 %v1538, 1e-05
    %v1576 = vmax.f32 %v1540, 1e-05
    %v1577 = vmax.f32 %v1542, 1e-05
    %v1578 = vmax.f32 %v1544, 1e-05
    %v1579 = vmax.f32 %v1546, 1e-05
    %v1580 = vmax.f32 %v1548, 1e-05
    %v1581 = vmin.f32 %v1549, 1000000.0
    %v1582 = vmin.f32 %v1550, 1000000.0
    %v1583 = vmin.f32 %v1551, 1000000.0
    %v1584 = vmin.f32 %v1552, 1000000.0
    %v1585 = vmin.f32 %v1553, 1000000.0
    %v1586 = vmin.f32 %v1554, 1000000.0
    %v1587 = vmin.f32 %v1555, 1000000.0
    %v1588 = vmin.f32 %v1556, 1000000.0
    %v1589 = vmin.f32 %v1557, 1000000.0
    %v1590 = vmin.f32 %v1558, 1000000.0
    %v1591 = vmin.f32 %v1559, 1000000.0
    %v1592 = vmin.f32 %v1560, 1000000.0
    %v1593 = vmin.f32 %v1561, 1000000.0
    %v1594 = vmin.f32 %v1562, 1000000.0
    %v1595 = vmin.f32 %v1563, 1000000.0
    %v1596 = vmin.f32 %v1564, 1000000.0
    %v1597 = vmin.f32 %v1565, 1000000.0
    %v1598 = vmin.f32 %v1566, 1000000.0
    %v1599 = vmin.f32 %v1567, 1000000.0
    %v1600 = vmin.f32 %v1568, 1000000.0
    %v1601 = vmin.f32 %v1569, 1000000.0
    %v1602 = vmin.f32 %v1570, 1000000.0
    %v1603 = vmin.f32 %v1571, 1000000.0
    %v1604 = vmin.f32 %v1572, 1000000.0
    %v1605 = vmin.f32 %v1573, 1000000.0
    %v1606 = vmin.f32 %v1574, 1000000.0
    %v1607 = vmin.f32 %v1575, 1000000.0
    %v1608 = vmin.f32 %v1576, 1000000.0
    %v1609 = vmin.f32 %v1577, 1000000.0
    %v1610 = vmin.f32 %v1578, 1000000.0
    %v1611 = vmin.f32 %v1579, 1000000.0
    %v1612 = vmin.f32 %v1580, 1000000.0
    %1613 = vst [vmem:[#allocation8] sm:$0xff] %v1581
    %1614 = vst [vmem:[#allocation8 + $0x8] sm:$0xff] %v1582
    %1615 = vst [vmem:[#allocation8 + $0x10] sm:$0xff] %v1583
    %1616 = vst [vmem:[#allocation8 + $0x18] sm:$0xff] %v1584
    %1617 = vst [vmem:[#allocation8 + $0x20] sm:$0xff] %v1585
    %1618 = vst [vmem:[#allocation8 + $0x28] sm:$0xff] %v1586
    %1619 = vst [vmem:[#allocation8 + $0x30] sm:$0xff] %v1587
    %1620 = vst [vmem:[#allocation8 + $0x38] sm:$0xff] %v1588
    %1621 = vst [vmem:[#allocation8 + $0x40] sm:$0xff] %v1589
    %1622 = vst [vmem:[#allocation8 + $0x48] sm:$0xff] %v1590
    %1623 = vst [vmem:[#allocation8 + $0x50] sm:$0xff] %v1591
    %1624 = vst [vmem:[#allocation8 + $0x58] sm:$0xff] %v1592
    %1625 = vst [vmem:[#allocation8 + $0x60] sm:$0xff] %v1593
    %1626 = vst [vmem:[#allocation8 + $0x68] sm:$0xff] %v1594
    %1627 = vst [vmem:[#allocation8 + $0x70] sm:$0xff] %v1595
    %1628 = vst [vmem:[#allocation8 + $0x78] sm:$0xff] %v1596
    %1629 = vst [vmem:[#allocation8 + $0x80] sm:$0xff] %v1597
    %1630 = vst [vmem:[#allocation8 + $0x88] sm:$0xff] %v1598
    %1631 = vst [vmem:[#allocation8 + $0x90] sm:$0xff] %v1599
    %1632 = vst [vmem:[#allocation8 + $0x98] sm:$0xff] %v1600
    %1633 = vst [vmem:[#allocation8 + $0xa0] sm:$0xff] %v1601
    %1634 = vst [vmem:[#allocation8 + $0xa8] sm:$0xff] %v1602
    %1635 = vst [vmem:[#allocation8 + $0xb0] sm:$0xff] %v1603
    %1636 = vst [vmem:[#allocation8 + $0xb8] sm:$0xff] %v1604
    %1637 = vst [vmem:[#allocation8 + $0xc0] sm:$0xff] %v1605
    %1638 = vst [vmem:[#allocation8 + $0xc8] sm:$0xff] %v1606
    %1639 = vst [vmem:[#allocation8 + $0xd0] sm:$0xff] %v1607
    %1640 = vst [vmem:[#allocation8 + $0xd8] sm:$0xff] %v1608
    %1641 = vst [vmem:[#allocation8 + $0xe0] sm:$0xff] %v1609
    %1642 = vst [vmem:[#allocation8 + $0xe8] sm:$0xff] %v1610
    %1643 = vst [vmem:[#allocation8 + $0xf0] sm:$0xff] %v1611
    %1644 = vst [vmem:[#allocation8 + $0xf8] sm:$0xff] %v1612
    // Predicated region
    $region46: #{tpu_custom_call.1} parent=1 // pred_check
      _
    $region47: #{tpu_custom_call.1} parent=1 // pred_check_branch
      %1646 = sbr.rel (0) target = $region49
    $region48: #{tpu_custom_call.1} parent=1 // pred_region
      %s1648 = ssub.s32 4096, 4096
      %1649 = vsyncadd [#allocation4], %s1648
      %s1650 = sshll.u32 [#allocation8], 4
      %s1651 = int_to_ptr.vmem [resolvable:$true] %s1650
      %1656 = dma.vmem_to_hbm [thread:$0]  %s1651, 4096, %s8, [#allocation4], 128, 128, 8
    $region49: #{tpu_custom_call.1} parent=1 // pred_fallthru
      _
    // Predicated region
    $region50: #{tpu_custom_call.1} parent=1 // pred_check
      _
    $region51: #{tpu_custom_call.1} parent=1 // pred_check_branch
      %1658 = sbr.rel (0) target = $region53
    $region52: #{tpu_custom_call.1} parent=1 // pred_region
      %1659 = dma.done [#allocation4], 4096
    $region53: #{tpu_custom_call.1} parent=1 // pred_fallthru
      _
    %1660 = vsyncpa [#allocation3], 1
    %1661 = vsyncpa [#allocation6], 1
    %1662 = vsyncpa [#allocation4], 1

</llo_original>
